<compile_context>
chip_gen: v6e
topology: v6e:2x2x1
jax: 0.10.0
libtpu: 0.0.40
codegen_flags: <defaults>
</compile_context>

<pallas_src>
import jax
import jax.numpy as jnp
from jax import lax
from jax.experimental import pallas as pl
from jax.experimental.pallas import tpu as pltpu

EPS = 1e-5


# ----------------------------- Pallas kernels -----------------------------

def _conv_accumulate(p, w_ref, hp, wp, cin, co):
    """3x3 conv over a zero-padded (hp+2, wp+2, cin) bf16 tile -> (hp*wp, co) f32.

    w_ref holds the weights flattened tap-major as (9*cin, co) bf16.
    """
    if cin < 128:
        # Fold all 9 taps into the contraction dim: one K = 9*cin matmul
        # (avoids 9 MXU passes with tiny K on the 256-deep v6e/v7x MXUs).
        cols = [p[ky:ky + hp, kx:kx + wp, :]
                for ky in range(3) for kx in range(3)]
        patches = jnp.concatenate(cols, axis=-1).reshape(hp * wp, 9 * cin)
        return jnp.dot(patches, w_ref[...], preferred_element_type=jnp.float32)
    # Large cin: K = cin already fills the MXU; 9 shifted matmuls, f32 acc.
    w = w_ref[...].reshape(9, cin, co)
    acc = jnp.zeros((hp * wp, co), jnp.float32)
    for t in range(9):
        ky, kx = divmod(t, 3)
        slab = p[ky:ky + hp, kx:kx + wp, :].reshape(hp * wp, cin)
        acc = acc + jnp.dot(slab, w[t], preferred_element_type=jnp.float32)
    return acc


def _make_conv1_kernel(hp, wp, cin, co):
    """Conv1: input tile arrives pre-padded (halo materialised in the pool glue).

    Refs:
      xp_ref : (1, hp+2, wp+2, cin) bf16   zero-padded pooled input tile
      w_ref  : (9*cin, co)          bf16   flattened tap-major weights (resident)
      y_ref  : (1, hp, wp, co)      bf16   pre-BN conv output
      s_ref  : (1, co)              f32    resident accumulator: sum(y)
      ss_ref : (1, co)              f32    resident accumulator: sum(y*y)
    """
    def kernel(xp_ref, w_ref, y_ref, s_ref, ss_ref):
        @pl.when(pl.program_id(0) == 0)
        def _():
            s_ref[...] = jnp.zeros_like(s_ref)
            ss_ref[...] = jnp.zeros_like(ss_ref)

        acc = _conv_accumulate(xp_ref[0], w_ref, hp, wp, cin, co)
        y_ref[0] = acc.reshape(hp, wp, co).astype(y_ref.dtype)
        # NOTE: E[y^2]-E[y]^2 finalize is cancellation-prone if channel means are
        # huge; acceptable here (f32 sums, moderate magnitudes, var clamped >= 0).
        s_ref[...] += jnp.sum(acc, axis=0, keepdims=True)
        ss_ref[...] += jnp.sum(acc * acc, axis=0, keepdims=True)

    return kernel


def _make_conv2_kernel(hp, wp, cin, co):
    """Conv2 with BN1-affine + ReLU1 fused into its input read.

    Refs:
      x_ref     : (1, hp, wp, cin)    bf16  pre-BN conv1 output tile
      w_ref     : (9*cin, co)         bf16  flattened tap-major weights (resident)
      scale_ref : (1, cin)            f32   BN1 scale (resident)
      shift_ref : (1, cin)            f32   BN1 shift (resident)
      y_ref     : (1, hp, wp, co)     bf16  pre-BN conv output
      s_ref     : (1, co)             f32   resident accumulator: sum(y)
      ss_ref    : (1, co)             f32   resident accumulator: sum(y*y)
      pad_ref   : (hp+2, wp+2, cin)   bf16  VMEM scratch: padded activation
    """
    def kernel(x_ref, w_ref, scale_ref, shift_ref, y_ref, s_ref, ss_ref, pad_ref):
        @pl.when(pl.program_id(0) == 0)
        def _():
            # Zero the scratch once (only its 1-pixel halo matters afterwards);
            # the interior is fully overwritten every grid step -> no per-step
            # memset competing for the store slot.
            pad_ref[...] = jnp.zeros_like(pad_ref)
            s_ref[...] = jnp.zeros_like(s_ref)
            ss_ref[...] = jnp.zeros_like(ss_ref)

        # Fused BatchNorm1 affine + ReLU1 (f32 epilogue math), downcast to bf16
        # MXU operands while writing the scratch interior.
        a = x_ref[0].astype(jnp.float32)
        a = jnp.maximum(a * scale_ref[...].reshape(1, 1, cin)
                        + shift_ref[...].reshape(1, 1, cin), 0.0)
        pad_ref[1:hp + 1, 1:wp + 1, :] = a.astype(pad_ref.dtype)

        acc = _conv_accumulate(pad_ref[...], w_ref, hp, wp, cin, co)
        y_ref[0] = acc.reshape(hp, wp, co).astype(y_ref.dtype)
        s_ref[...] += jnp.sum(acc, axis=0, keepdims=True)
        ss_ref[...] += jnp.sum(acc * acc, axis=0, keepdims=True)

    return kernel


def _make_bn_relu_kernel(hp, wp, co):
    """BN2 affine + ReLU2 in one folded VPU pass; bf16 in, f32 out (NHWC)."""
    def kernel(y_ref, scale_ref, shift_ref, o_ref):
        y = y_ref[0].astype(jnp.float32)
        z = jnp.maximum(y * scale_ref[...].reshape(1, 1, co)
                        + shift_ref[...].reshape(1, 1, co), 0.0)
        o_ref[0] = z.astype(o_ref.dtype)
    return kernel


# ------------------------------- wrappers ----------------------------------

def _mosaic_params(block_bytes, semantics):
    # Explicit scoped-VMEM budget: double-buffered blocks + margin, capped well
    # below v7x's 64 MiB physical VMEM (fine on v5e/v6e too).
    vmem = int(min(max(2 * block_bytes + (2 << 20), 8 << 20), 48 << 20))
    return pltpu.CompilerParams(dimension_semantics=semantics,
                                vmem_limit_bytes=vmem)


def _conv1(x_pad, w_flat):
    n, hpad, wpad, cin = x_pad.shape
    hp, wp = hpad - 2, wpad - 2
    co = w_flat.shape[-1]
    block_bytes = (hpad * wpad * cin * 2 + hp * wp * co * 2
                   + w_flat.size * 2 + 2 * co * 4 + (hp + 2) * (wp + 2) * cin * 2)
    return pl.pallas_call(
        _make_conv1_kernel(hp, wp, cin, co),
        out_shape=(
            jax.ShapeDtypeStruct((n, hp, wp, co), jnp.bfloat16),
            jax.ShapeDtypeStruct((1, co), jnp.float32),
            jax.ShapeDtypeStruct((1, co), jnp.float32),
        ),
        grid=(n,),
        in_specs=[
            pl.BlockSpec((1, hpad, wpad, cin), lambda i: (i, 0, 0, 0)),
            pl.BlockSpec((9 * cin, co), lambda i: (0, 0)),      # resident weights
        ],
        out_specs=(
            pl.BlockSpec((1, hp, wp, co), lambda i: (i, 0, 0, 0)),
            pl.BlockSpec((1, co), lambda i: (0, 0)),             # resident stats acc
            pl.BlockSpec((1, co), lambda i: (0, 0)),             # resident stats acc
        ),
        # "arbitrary": the resident stats accumulators are carried across the
        # batch axis (sequential reduction).
        compiler_params=_mosaic_params(block_bytes, ("arbitrary",)),
    )(x_pad, w_flat)


def _conv2(y1, w_flat, scale1, shift1):
    n, hp, wp, cin = y1.shape
    co = w_flat.shape[-1]
    block_bytes = (hp * wp * cin * 2 + hp * wp * co * 2 + w_flat.size * 2
                   + (hp + 2) * (wp + 2) * cin * 2 + 2 * cin * 4 + 2 * co * 4)
    return pl.pallas_call(
        _make_conv2_kernel(hp, wp, cin, co),
        out_shape=(
            jax.ShapeDtypeStruct((n, hp, wp, co), jnp.bfloat16),
            jax.ShapeDtypeStruct((1, co), jnp.float32),
            jax.ShapeDtypeStruct((1, co), jnp.float32),
        ),
        grid=(n,),
        in_specs=[
            pl.BlockSpec((1, hp, wp, cin), lambda i: (i, 0, 0, 0)),
            pl.BlockSpec((9 * cin, co), lambda i: (0, 0)),       # resident weights
            pl.BlockSpec((1, cin), lambda i: (0, 0)),            # resident BN1 scale
            pl.BlockSpec((1, cin), lambda i: (0, 0)),            # resident BN1 shift
        ],
        out_specs=(
            pl.BlockSpec((1, hp, wp, co), lambda i: (i, 0, 0, 0)),
            pl.BlockSpec((1, co), lambda i: (0, 0)),
            pl.BlockSpec((1, co), lambda i: (0, 0)),
        ),
        scratch_shapes=[pltpu.VMEM((hp + 2, wp + 2, cin), jnp.bfloat16)],
        compiler_params=_mosaic_params(block_bytes, ("arbitrary",)),
    )(y1, w_flat, scale1, shift1)


def _bn_relu(y, scale, shift):
    n, hp, wp, co = y.shape
    block_bytes = hp * wp * co * (2 + 4) + 2 * co * 4
    return pl.pallas_call(
        _make_bn_relu_kernel(hp, wp, co),
        out_shape=jax.ShapeDtypeStruct((n, hp, wp, co), jnp.float32),
        grid=(n,),
        in_specs=[
            pl.BlockSpec((1, hp, wp, co), lambda i: (i, 0, 0, 0)),
            pl.BlockSpec((1, co), lambda i: (0, 0)),
            pl.BlockSpec((1, co), lambda i: (0, 0)),
        ],
        out_specs=pl.BlockSpec((1, hp, wp, co), lambda i: (i, 0, 0, 0)),
        compiler_params=_mosaic_params(block_bytes, ("parallel",)),
    )(y, scale, shift)


def _bn_scale_shift(s, ss, gamma, beta, count):
    """Finalize training-mode BatchNorm (biased variance) from the on-chip sums."""
    mean = s[0] / count                                   # (co,)
    var = jnp.maximum(ss[0] / count - mean * mean, 0.0)   # (co,)
    scale = gamma * lax.rsqrt(var + EPS)
    shift = beta - mean * scale
    return scale.reshape(1, -1), shift.reshape(1, -1)


def down_forward(params, x):
    """Down.forward(x): MaxPool2d(2) -> (Conv3x3 -> BN -> ReLU) x 2.  x: NCHW f32."""
    n, cin, h, w = x.shape
    hp, wp = h // 2, w // 2

    # Glue: NCHW -> NHWC, 2x2 max-pool, and the conv1 1-pixel halo pad, fused by
    # XLA into one cheap pass over x; the result is 1/4-size and stored as bf16
    # (MXU operands are bf16 anyway, so this halves the conv1 input HBM traffic).
    xh = jnp.transpose(x, (0, 2, 3, 1))
    pooled = jnp.maximum(
        jnp.maximum(xh[:, 0::2, 0::2, :], xh[:, 0::2, 1::2, :]),
        jnp.maximum(xh[:, 1::2, 0::2, :], xh[:, 1::2, 1::2, :]))     # (N, Hp, Wp, Cin)
    x_pad = jnp.pad(pooled, ((0, 0), (1, 1), (1, 1), (0, 0))).astype(jnp.bfloat16)

    # PyTorch (Co, Ci, 3, 3) -> tap-major (3, 3, Ci, Co) -> flat (9*Ci, Co), bf16.
    co1 = params["w1"].shape[0]
    co2 = params["w2"].shape[0]
    w1 = jnp.transpose(params["w1"], (2, 3, 1, 0)).reshape(9 * cin, co1).astype(jnp.bfloat16)
    w2 = jnp.transpose(params["w2"], (2, 3, 1, 0)).reshape(9 * co1, co2).astype(jnp.bfloat16)
    # Conv biases omitted: exactly cancelled by training-mode BN mean subtraction.

    count = n * hp * wp

    # Pass 1: conv1 + on-chip BN1 partial stats (single resident accumulator).
    y1, s1, ss1 = _conv1(x_pad, w1)
    scale1, shift1 = _bn_scale_shift(s1, ss1, params["g1"], params["beta1"], count)

    # Pass 2: conv2 with BN1 + ReLU1 fused into its input read, + BN2 stats.
    y2, s2, ss2 = _conv2(y1, w2, scale1, shift1)
    scale2, shift2 = _bn_scale_shift(s2, ss2, params["g2"], params["beta2"], count)

    # Pass 3: BN2 + ReLU2, then NCHW at the API boundary.
    # TODO(synk): fuse the NHWC->NCHW transpose into the BN2 kernel (in-kernel
    # minor-dim transpose) or keep NHWC if the consuming Up/Down block takes it.
    out_nhwc = _bn_relu(y2, scale2, shift2)
    return jnp.transpose(out_nhwc, (0, 3, 1, 2))


# --------------------------- pure-JAX reference ----------------------------

def down_reference(params, x):
    p = jnp.maximum(
        jnp.maximum(x[:, :, 0::2, 0::2], x[:, :, 0::2, 1::2]),
        jnp.maximum(x[:, :, 1::2, 0::2], x[:, :, 1::2, 1::2]))

    def cbr(z, w, b, g, be):
        y = lax.conv_general_dilated(z, w, (1, 1), ((1, 1), (1, 1)),
                                     dimension_numbers=("NCHW", "OIHW", "NCHW"))
        y = y + b.reshape(1, -1, 1, 1)
        mean = y.mean(axis=(0, 2, 3), keepdims=True)
        var = ((y - mean) ** 2).mean(axis=(0, 2, 3), keepdims=True)
        y = (y - mean) * lax.rsqrt(var + EPS)
        y = y * g.reshape(1, -1, 1, 1) + be.reshape(1, -1, 1, 1)
        return jnp.maximum(y, 0.0)

    y = cbr(p, params["w1"], params["b1"], params["g1"], params["beta1"])
    y = cbr(y, params["w2"], params["b2"], params["g2"], params["beta2"])
    return y


# ---------------------------------- main -----------------------------------

if __name__ == "__main__":
    key = jax.random.PRNGKey(0)
    ks = jax.random.split(key, 10)

    N = 2
    in_channels, out_channels = 4, 8
    H = W = 16

    x = jax.random.normal(ks[0], (N, in_channels, H, W), jnp.float32)

    params = {
        # Conv2d(in_channels, out_channels, 3, padding=1)
        "w1": 0.1 * jax.random.normal(ks[1], (out_channels, in_channels, 3, 3), jnp.float32),
        "b1": 0.1 * jax.random.normal(ks[2], (out_channels,), jnp.float32),
        # BatchNorm2d(out_channels) affine
        "g1": 1.0 + 0.1 * jax.random.normal(ks[3], (out_channels,), jnp.float32),
        "beta1": 0.1 * jax.random.normal(ks[4], (out_channels,), jnp.float32),
        # Conv2d(out_channels, out_channels, 3, padding=1)
        "w2": 0.1 * jax.random.normal(ks[5], (out_channels, out_channels, 3, 3), jnp.float32),
        "b2": 0.1 * jax.random.normal(ks[6], (out_channels,), jnp.float32),
        "g2": 1.0 + 0.1 * jax.random.normal(ks[7], (out_channels,), jnp.float32),
        "beta2": 0.1 * jax.random.normal(ks[8], (out_channels,), jnp.float32),
    }

    out = jax.jit(down_forward)(params, x)
    out = jax.block_until_ready(out)

    assert out.shape == (N, out_channels, H // 2, W // 2), out.shape
    ref = down_reference(params, x)
    # Tolerance accounts for bf16 MXU operands + bf16 HBM intermediates
    # (f32 accumulation and f32 BN math) in the Pallas path.
    if not jnp.allclose(out, ref, rtol=2e-2, atol=2e-2):
        raise AssertionError(
            f"Pallas result mismatch: max abs err = {jnp.max(jnp.abs(out - ref))}")

    print("KERNEL_OK")
</pallas_src>

<mosaic_0001>
module attributes {stable_mosaic.version = 11 : i64} {
  func.func @kernel(%arg0: i32, %arg1: memref<1x8x8x8xbf16, #tpu.memory_space<vmem>>, %arg2: memref<1x8xf32, #tpu.memory_space<vmem>>, %arg3: memref<1x8xf32, #tpu.memory_space<vmem>>, %arg4: memref<1x8x8x8xf32, #tpu.memory_space<vmem>>) attributes {dimension_semantics = [#tpu.dimension_semantics<parallel>], iteration_bounds = array<i64: 2>, scalar_prefetch = 0 : i64, scratch_operands = 0 : i64, tpu.core_type = #tpu.core_type<tc>, window_params = [{transform_indices = @transform_0, window_bounds = array<i64: 1, 8, 8, 8>}, {pipeline_mode = #tpu.pipeline_mode<synchronous>, transform_indices = @transform_1, window_bounds = array<i64: 1, 8>}, {pipeline_mode = #tpu.pipeline_mode<synchronous>, transform_indices = @transform_2, window_bounds = array<i64: 1, 8>}, {transform_indices = @transform_3, window_bounds = array<i64: 1, 8, 8, 8>}]} {
    %c0 = arith.constant 0 : index
    %c0_0 = arith.constant 0 : index
    %c0_1 = arith.constant 0 : index
    %c0_2 = arith.constant 0 : index
    %0 = vector.load %arg1[%c0, %c0_0, %c0_1, %c0_2] : memref<1x8x8x8xbf16, #tpu.memory_space<vmem>>, vector<1x8x8x8xbf16>
    %1 = vector.shape_cast %0 : vector<1x8x8x8xbf16> to vector<8x8x8xbf16>
    %2 = arith.extf %1 : vector<8x8x8xbf16> to vector<8x8x8xf32>
    %c0_3 = arith.constant 0 : index
    %c0_4 = arith.constant 0 : index
    %3 = vector.load %arg2[%c0_3, %c0_4] : memref<1x8xf32, #tpu.memory_space<vmem>>, vector<1x8xf32>
    %4 = vector.shape_cast %3 : vector<1x8xf32> to vector<1x1x8xf32>
    %5 = vector.broadcast %4 : vector<1x1x8xf32> to vector<8x8x8xf32>
    %6 = arith.mulf %2, %5 : vector<8x8x8xf32>
    %c0_5 = arith.constant 0 : index
    %c0_6 = arith.constant 0 : index
    %7 = vector.load %arg3[%c0_5, %c0_6] : memref<1x8xf32, #tpu.memory_space<vmem>>, vector<1x8xf32>
    %8 = vector.shape_cast %7 : vector<1x8xf32> to vector<1x1x8xf32>
    %9 = vector.broadcast %8 : vector<1x1x8xf32> to vector<8x8x8xf32>
    %10 = arith.addf %6, %9 : vector<8x8x8xf32>
    %cst = arith.constant 0.000000e+00 : f32
    %11 = vector.broadcast %cst : f32 to vector<8x8x8xf32>
    %12 = arith.maximumf %10, %11 : vector<8x8x8xf32>
    %c0_7 = arith.constant 0 : index
    %c0_8 = arith.constant 0 : index
    %c0_9 = arith.constant 0 : index
    %c0_10 = arith.constant 0 : index
    %13 = vector.load %arg4[%c0_7, %c0_8, %c0_9, %c0_10] : memref<1x8x8x8xf32, #tpu.memory_space<vmem>>, vector<1x8x8x8xf32>
    %14 = vector.shape_cast %13 : vector<1x8x8x8xf32> to vector<8x8x8xf32>
    %15 = vector.shape_cast %12 : vector<8x8x8xf32> to vector<1x8x8x8xf32>
    tpu.vector_store %arg4[%c0_7, %c0_8, %c0_9, %c0_10], %15 {strides = array<i32>} : memref<1x8x8x8xf32, #tpu.memory_space<vmem>>, vector<1x8x8x8xf32>,
    return
  }
  func.func @transform_0(%arg0: i32) -> (i32, i32, i32, i32) {
    %c0_i32 = arith.constant 0 : i32
    %c0_i32_0 = arith.constant 0 : i32
    %c0_i32_1 = arith.constant 0 : i32
    %c0_i32_2 = arith.constant 0 : i32
    return %arg0, %c0_i32, %c0_i32_0, %c0_i32_1 : i32, i32, i32, i32
  }
  func.func @transform_1(%arg0: i32) -> (i32, i32) {
    %c0_i32 = arith.constant 0 : i32
    %c0_i32_0 = arith.constant 0 : i32
    %c0_i32_1 = arith.constant 0 : i32
    return %c0_i32, %c0_i32_0 : i32, i32
  }
  func.func @transform_2(%arg0: i32) -> (i32, i32) {
    %c0_i32 = arith.constant 0 : i32
    %c0_i32_0 = arith.constant 0 : i32
    %c0_i32_1 = arith.constant 0 : i32
    return %c0_i32, %c0_i32_0 : i32, i32
  }
  func.func @transform_3(%arg0: i32) -> (i32, i32, i32, i32) {
    %c0_i32 = arith.constant 0 : i32
    %c0_i32_0 = arith.constant 0 : i32
    %c0_i32_1 = arith.constant 0 : i32
    %c0_i32_2 = arith.constant 0 : i32
    return %arg0, %c0_i32, %c0_i32_0, %c0_i32_1 : i32, i32, i32, i32
  }
}

module attributes {stable_mosaic.version = 11 : i64} {
  func.func @kernel(%arg0: i32, %arg1: memref<1x10x10x4xbf16, #tpu.memory_space<vmem>>, %arg2: memref<36x8xbf16, #tpu.memory_space<vmem>>, %arg3: memref<1x8x8x8xbf16, #tpu.memory_space<vmem>>, %arg4: memref<1x8xf32, #tpu.memory_space<vmem>>, %arg5: memref<1x8xf32, #tpu.memory_space<vmem>>) attributes {dimension_semantics = [#tpu.dimension_semantics<arbitrary>], iteration_bounds = array<i64: 2>, scalar_prefetch = 0 : i64, scratch_operands = 0 : i64, tpu.core_type = #tpu.core_type<tc>, window_params = [{transform_indices = @transform_0, window_bounds = array<i64: 1, 10, 10, 4>}, {pipeline_mode = #tpu.pipeline_mode<synchronous>, transform_indices = @transform_1, window_bounds = array<i64: 36, 8>}, {transform_indices = @transform_2, window_bounds = array<i64: 1, 8, 8, 8>}, {pipeline_mode = #tpu.pipeline_mode<synchronous>, transform_indices = @transform_3, window_bounds = array<i64: 1, 8>}, {pipeline_mode = #tpu.pipeline_mode<synchronous>, transform_indices = @transform_4, window_bounds = array<i64: 1, 8>}]} {
    %c0_i32 = arith.constant 0 : i32
    %0 = arith.cmpi eq, %arg0, %c0_i32 : i32
    %1 = arith.extui %0 : i1 to i32
    %c0_i32_0 = arith.constant 0 : i32
    %2 = arith.cmpi ne, %1, %c0_i32_0 : i32
    scf.if %2 {
      %cst_20 = arith.constant 0.000000e+00 : f32
      %34 = vector.broadcast %cst_20 : f32 to vector<1x8xf32>
      %c0_21 = arith.constant 0 : index
      %c0_22 = arith.constant 0 : index
      %35 = vector.load %arg4[%c0_21, %c0_22] : memref<1x8xf32, #tpu.memory_space<vmem>>, vector<1x8xf32>
      tpu.vector_store %arg4[%c0_21, %c0_22], %34 {strides = array<i32>} : memref<1x8xf32, #tpu.memory_space<vmem>>, vector<1x8xf32>,
      %cst_23 = arith.constant 0.000000e+00 : f32
      %36 = vector.broadcast %cst_23 : f32 to vector<1x8xf32>
      %c0_24 = arith.constant 0 : index
      %c0_25 = arith.constant 0 : index
      %37 = vector.load %arg5[%c0_24, %c0_25] : memref<1x8xf32, #tpu.memory_space<vmem>>, vector<1x8xf32>
      tpu.vector_store %arg5[%c0_24, %c0_25], %36 {strides = array<i32>} : memref<1x8xf32, #tpu.memory_space<vmem>>, vector<1x8xf32>,
    } else {
    }
    %c0 = arith.constant 0 : index
    %c0_1 = arith.constant 0 : index
    %c0_2 = arith.constant 0 : index
    %c0_3 = arith.constant 0 : index
    %3 = vector.load %arg1[%c0, %c0_1, %c0_2, %c0_3] : memref<1x10x10x4xbf16, #tpu.memory_space<vmem>>, vector<1x10x10x4xbf16>
    %4 = vector.shape_cast %3 : vector<1x10x10x4xbf16> to vector<10x10x4xbf16>
    %5 = vector.extract_strided_slice %4 {offsets = [0, 0, 0], sizes = [8, 8, 4], strides = [1, 1, 1]} : vector<10x10x4xbf16> to vector<8x8x4xbf16>
    %6 = vector.extract_strided_slice %4 {offsets = [0, 1, 0], sizes = [8, 8, 4], strides = [1, 1, 1]} : vector<10x10x4xbf16> to vector<8x8x4xbf16>
    %7 = vector.extract_strided_slice %4 {offsets = [0, 2, 0], sizes = [8, 8, 4], strides = [1, 1, 1]} : vector<10x10x4xbf16> to vector<8x8x4xbf16>
    %8 = vector.extract_strided_slice %4 {offsets = [1, 0, 0], sizes = [8, 8, 4], strides = [1, 1, 1]} : vector<10x10x4xbf16> to vector<8x8x4xbf16>
    %9 = vector.extract_strided_slice %4 {offsets = [1, 1, 0], sizes = [8, 8, 4], strides = [1, 1, 1]} : vector<10x10x4xbf16> to vector<8x8x4xbf16>
    %10 = vector.extract_strided_slice %4 {offsets = [1, 2, 0], sizes = [8, 8, 4], strides = [1, 1, 1]} : vector<10x10x4xbf16> to vector<8x8x4xbf16>
    %11 = vector.extract_strided_slice %4 {offsets = [2, 0, 0], sizes = [8, 8, 4], strides = [1, 1, 1]} : vector<10x10x4xbf16> to vector<8x8x4xbf16>
    %12 = vector.extract_strided_slice %4 {offsets = [2, 1, 0], sizes = [8, 8, 4], strides = [1, 1, 1]} : vector<10x10x4xbf16> to vector<8x8x4xbf16>
    %13 = vector.extract_strided_slice %4 {offsets = [2, 2, 0], sizes = [8, 8, 4], strides = [1, 1, 1]} : vector<10x10x4xbf16> to vector<8x8x4xbf16>
    %14 = tpu.concatenate %5, %6, %7, %8, %9, %10, %11, %12, %13 in 2 : vector<8x8x4xbf16>, vector<8x8x4xbf16>, vector<8x8x4xbf16>, vector<8x8x4xbf16>, vector<8x8x4xbf16>, vector<8x8x4xbf16>, vector<8x8x4xbf16>, vector<8x8x4xbf16>, vector<8x8x4xbf16> -> vector<8x8x36xbf16>
    %15 = vector.shape_cast %14 : vector<8x8x36xbf16> to vector<64x36xbf16>
    %c0_4 = arith.constant 0 : index
    %c0_5 = arith.constant 0 : index
    %16 = vector.load %arg2[%c0_4, %c0_5] : memref<36x8xbf16, #tpu.memory_space<vmem>>, vector<36x8xbf16>
    %cst = arith.constant dense<0.000000e+00> : vector<64x8xf32>
    %17 = tpu.matmul %15, %16, %cst {dimension_numbers = #tpu.dot_dimension_numbers<[1], [0], [0], [1], [0, 0, 1, 1], [], []>} : vector<64x36xbf16>, vector<36x8xbf16>, vector<64x8xf32> -> vector<64x8xf32>
    %18 = vector.shape_cast %17 : vector<64x8xf32> to vector<8x8x8xf32>
    %19 = arith.truncf %18 : vector<8x8x8xf32> to vector<8x8x8xbf16>
    %c0_6 = arith.constant 0 : index
    %c0_7 = arith.constant 0 : index
    %c0_8 = arith.constant 0 : index
    %c0_9 = arith.constant 0 : index
    %20 = vector.load %arg3[%c0_6, %c0_7, %c0_8, %c0_9] : memref<1x8x8x8xbf16, #tpu.memory_space<vmem>>, vector<1x8x8x8xbf16>
    %21 = vector.shape_cast %20 : vector<1x8x8x8xbf16> to vector<8x8x8xbf16>
    %22 = vector.shape_cast %19 : vector<8x8x8xbf16> to vector<1x8x8x8xbf16>
    tpu.vector_store %arg3[%c0_6, %c0_7, %c0_8, %c0_9], %22 {strides = array<i32>} : memref<1x8x8x8xbf16, #tpu.memory_space<vmem>>, vector<1x8x8x8xbf16>,
    %c0_10 = arith.constant 0 : index
    %c0_11 = arith.constant 0 : index
    %23 = vector.load %arg4[%c0_10, %c0_11] : memref<1x8xf32, #tpu.memory_space<vmem>>, vector<1x8xf32>
    %cst_12 = arith.constant dense<0.000000e+00> : vector<8xf32>
    %24 = vector.multi_reduction <add>, %17, %cst_12 [0] : vector<64x8xf32> to vector<8xf32>
    %25 = vector.shape_cast %24 : vector<8xf32> to vector<1x8xf32>
    %26 = arith.addf %23, %25 : vector<1x8xf32>
    %c0_13 = arith.constant 0 : index
    %c0_14 = arith.constant 0 : index
    %27 = vector.load %arg4[%c0_13, %c0_14] : memref<1x8xf32, #tpu.memory_space<vmem>>, vector<1x8xf32>
    tpu.vector_store %arg4[%c0_13, %c0_14], %26 {strides = array<i32>} : memref<1x8xf32, #tpu.memory_space<vmem>>, vector<1x8xf32>,
    %c0_15 = arith.constant 0 : index
    %c0_16 = arith.constant 0 : index
    %28 = vector.load %arg5[%c0_15, %c0_16] : memref<1x8xf32, #tpu.memory_space<vmem>>, vector<1x8xf32>
    %29 = arith.mulf %17, %17 : vector<64x8xf32>
    %cst_17 = arith.constant dense<0.000000e+00> : vector<8xf32>
    %30 = vector.multi_reduction <add>, %29, %cst_17 [0] : vector<64x8xf32> to vector<8xf32>
    %31 = vector.shape_cast %30 : vector<8xf32> to vector<1x8xf32>
    %32 = arith.addf %28, %31 : vector<1x8xf32>
    %c0_18 = arith.constant 0 : index
    %c0_19 = arith.constant 0 : index
    %33 = vector.load %arg5[%c0_18, %c0_19] : memref<1x8xf32, #tpu.memory_space<vmem>>, vector<1x8xf32>
    tpu.vector_store %arg5[%c0_18, %c0_19], %32 {strides = array<i32>} : memref<1x8xf32, #tpu.memory_space<vmem>>, vector<1x8xf32>,
    return
  }
  func.func @transform_0(%arg0: i32) -> (i32, i32, i32, i32) {
    %c0_i32 = arith.constant 0 : i32
    %c0_i32_0 = arith.constant 0 : i32
    %c0_i32_1 = arith.constant 0 : i32
    %c0_i32_2 = arith.constant 0 : i32
    return %arg0, %c0_i32, %c0_i32_0, %c0_i32_1 : i32, i32, i32, i32
  }
  func.func @transform_1(%arg0: i32) -> (i32, i32) {
    %c0_i32 = arith.constant 0 : i32
    %c0_i32_0 = arith.constant 0 : i32
    %c0_i32_1 = arith.constant 0 : i32
    return %c0_i32, %c0_i32_0 : i32, i32
  }
  func.func @transform_2(%arg0: i32) -> (i32, i32, i32, i32) {
    %c0_i32 = arith.constant 0 : i32
    %c0_i32_0 = arith.constant 0 : i32
    %c0_i32_1 = arith.constant 0 : i32
    %c0_i32_2 = arith.constant 0 : i32
    return %arg0, %c0_i32, %c0_i32_0, %c0_i32_1 : i32, i32, i32, i32
  }
  func.func @transform_3(%arg0: i32) -> (i32, i32) {
    %c0_i32 = arith.constant 0 : i32
    %c0_i32_0 = arith.constant 0 : i32
    %c0_i32_1 = arith.constant 0 : i32
    return %c0_i32, %c0_i32_0 : i32, i32
  }
  func.func @transform_4(%arg0: i32) -> (i32, i32) {
    %c0_i32 = arith.constant 0 : i32
    %c0_i32_0 = arith.constant 0 : i32
    %c0_i32_1 = arith.constant 0 : i32
    return %c0_i32, %c0_i32_0 : i32, i32
  }
}

module attributes {stable_mosaic.version = 11 : i64} {
  func.func @kernel(%arg0: i32, %arg1: memref<1x8x8x8xbf16, #tpu.memory_space<vmem>>, %arg2: memref<72x8xbf16, #tpu.memory_space<vmem>>, %arg3: memref<1x8xf32, #tpu.memory_space<vmem>>, %arg4: memref<1x8xf32, #tpu.memory_space<vmem>>, %arg5: memref<1x8x8x8xbf16, #tpu.memory_space<vmem>>, %arg6: memref<1x8xf32, #tpu.memory_space<vmem>>, %arg7: memref<1x8xf32, #tpu.memory_space<vmem>>, %arg8: memref<10x10x8xbf16, #tpu.memory_space<vmem>>) attributes {dimension_semantics = [#tpu.dimension_semantics<arbitrary>], iteration_bounds = array<i64: 2>, scalar_prefetch = 0 : i64, scratch_operands = 1 : i64, tpu.core_type = #tpu.core_type<tc>, window_params = [{transform_indices = @transform_0, window_bounds = array<i64: 1, 8, 8, 8>}, {pipeline_mode = #tpu.pipeline_mode<synchronous>, transform_indices = @transform_1, window_bounds = array<i64: 72, 8>}, {pipeline_mode = #tpu.pipeline_mode<synchronous>, transform_indices = @transform_2, window_bounds = array<i64: 1, 8>}, {pipeline_mode = #tpu.pipeline_mode<synchronous>, transform_indices = @transform_3, window_bounds = array<i64: 1, 8>}, {transform_indices = @transform_4, window_bounds = array<i64: 1, 8, 8, 8>}, {pipeline_mode = #tpu.pipeline_mode<synchronous>, transform_indices = @transform_5, window_bounds = array<i64: 1, 8>}, {pipeline_mode = #tpu.pipeline_mode<synchronous>, transform_indices = @transform_6, window_bounds = array<i64: 1, 8>}]} {
    %c0_i32 = arith.constant 0 : i32
    %0 = arith.cmpi eq, %arg0, %c0_i32 : i32
    %1 = arith.extui %0 : i1 to i32
    %c0_i32_0 = arith.constant 0 : i32
    %2 = arith.cmpi ne, %1, %c0_i32_0 : i32
    scf.if %2 {
      %cst_30 = arith.constant 0.000000e+00 : bf16
      %48 = vector.broadcast %cst_30 : bf16 to vector<10x10x8xbf16>
      %c0_31 = arith.constant 0 : index
      %c0_32 = arith.constant 0 : index
      %c0_33 = arith.constant 0 : index
      %49 = vector.load %arg8[%c0_31, %c0_32, %c0_33] : memref<10x10x8xbf16, #tpu.memory_space<vmem>>, vector<10x10x8xbf16>
      tpu.vector_store %arg8[%c0_31, %c0_32, %c0_33], %48 {strides = array<i32>} : memref<10x10x8xbf16, #tpu.memory_space<vmem>>, vector<10x10x8xbf16>,
      %cst_34 = arith.constant 0.000000e+00 : f32
      %50 = vector.broadcast %cst_34 : f32 to vector<1x8xf32>
      %c0_35 = arith.constant 0 : index
      %c0_36 = arith.constant 0 : index
      %51 = vector.load %arg6[%c0_35, %c0_36] : memref<1x8xf32, #tpu.memory_space<vmem>>, vector<1x8xf32>
      tpu.vector_store %arg6[%c0_35, %c0_36], %50 {strides = array<i32>} : memref<1x8xf32, #tpu.memory_space<vmem>>, vector<1x8xf32>,
      %cst_37 = arith.constant 0.000000e+00 : f32
      %52 = vector.broadcast %cst_37 : f32 to vector<1x8xf32>
      %c0_38 = arith.constant 0 : index
      %c0_39 = arith.constant 0 : index
      %53 = vector.load %arg7[%c0_38, %c0_39] : memref<1x8xf32, #tpu.memory_space<vmem>>, vector<1x8xf32>
      tpu.vector_store %arg7[%c0_38, %c0_39], %52 {strides = array<i32>} : memref<1x8xf32, #tpu.memory_space<vmem>>, vector<1x8xf32>,
    } else {
    }
    %c0 = arith.constant 0 : index
    %c0_1 = arith.constant 0 : index
    %c0_2 = arith.constant 0 : index
    %c0_3 = arith.constant 0 : index
    %3 = vector.load %arg1[%c0, %c0_1, %c0_2, %c0_3] : memref<1x8x8x8xbf16, #tpu.memory_space<vmem>>, vector<1x8x8x8xbf16>
    %4 = vector.shape_cast %3 : vector<1x8x8x8xbf16> to vector<8x8x8xbf16>
    %5 = arith.extf %4 : vector<8x8x8xbf16> to vector<8x8x8xf32>
    %c0_4 = arith.constant 0 : index
    %c0_5 = arith.constant 0 : index
    %6 = vector.load %arg3[%c0_4, %c0_5] : memref<1x8xf32, #tpu.memory_space<vmem>>, vector<1x8xf32>
    %7 = vector.shape_cast %6 : vector<1x8xf32> to vector<1x1x8xf32>
    %8 = vector.broadcast %7 : vector<1x1x8xf32> to vector<8x8x8xf32>
    %9 = arith.mulf %5, %8 : vector<8x8x8xf32>
    %c0_6 = arith.constant 0 : index
    %c0_7 = arith.constant 0 : index
    %10 = vector.load %arg4[%c0_6, %c0_7] : memref<1x8xf32, #tpu.memory_space<vmem>>, vector<1x8xf32>
    %11 = vector.shape_cast %10 : vector<1x8xf32> to vector<1x1x8xf32>
    %12 = vector.broadcast %11 : vector<1x1x8xf32> to vector<8x8x8xf32>
    %13 = arith.addf %9, %12 : vector<8x8x8xf32>
    %cst = arith.constant 0.000000e+00 : f32
    %14 = vector.broadcast %cst : f32 to vector<8x8x8xf32>
    %15 = arith.maximumf %13, %14 : vector<8x8x8xf32>
    %16 = arith.truncf %15 : vector<8x8x8xf32> to vector<8x8x8xbf16>
    %c1 = arith.constant 1 : index
    %c1_8 = arith.constant 1 : index
    %c0_9 = arith.constant 0 : index
    %17 = vector.load %arg8[%c1, %c1_8, %c0_9] : memref<10x10x8xbf16, #tpu.memory_space<vmem>>, vector<8x8x8xbf16>
    tpu.vector_store %arg8[%c1, %c1_8, %c0_9], %16 {strides = array<i32>} : memref<10x10x8xbf16, #tpu.memory_space<vmem>>, vector<8x8x8xbf16>,
    %c0_10 = arith.constant 0 : index
    %c0_11 = arith.constant 0 : index
    %c0_12 = arith.constant 0 : index
    %18 = vector.load %arg8[%c0_10, %c0_11, %c0_12] : memref<10x10x8xbf16, #tpu.memory_space<vmem>>, vector<10x10x8xbf16>
    %19 = vector.extract_strided_slice %18 {offsets = [0, 0, 0], sizes = [8, 8, 8], strides = [1, 1, 1]} : vector<10x10x8xbf16> to vector<8x8x8xbf16>
    %20 = vector.extract_strided_slice %18 {offsets = [0, 1, 0], sizes = [8, 8, 8], strides = [1, 1, 1]} : vector<10x10x8xbf16> to vector<8x8x8xbf16>
    %21 = vector.extract_strided_slice %18 {offsets = [0, 2, 0], sizes = [8, 8, 8], strides = [1, 1, 1]} : vector<10x10x8xbf16> to vector<8x8x8xbf16>
    %22 = vector.extract_strided_slice %18 {offsets = [1, 0, 0], sizes = [8, 8, 8], strides = [1, 1, 1]} : vector<10x10x8xbf16> to vector<8x8x8xbf16>
    %23 = vector.extract_strided_slice %18 {offsets = [1, 1, 0], sizes = [8, 8, 8], strides = [1, 1, 1]} : vector<10x10x8xbf16> to vector<8x8x8xbf16>
    %24 = vector.extract_strided_slice %18 {offsets = [1, 2, 0], sizes = [8, 8, 8], strides = [1, 1, 1]} : vector<10x10x8xbf16> to vector<8x8x8xbf16>
    %25 = vector.extract_strided_slice %18 {offsets = [2, 0, 0], sizes = [8, 8, 8], strides = [1, 1, 1]} : vector<10x10x8xbf16> to vector<8x8x8xbf16>
    %26 = vector.extract_strided_slice %18 {offsets = [2, 1, 0], sizes = [8, 8, 8], strides = [1, 1, 1]} : vector<10x10x8xbf16> to vector<8x8x8xbf16>
    %27 = vector.extract_strided_slice %18 {offsets = [2, 2, 0], sizes = [8, 8, 8], strides = [1, 1, 1]} : vector<10x10x8xbf16> to vector<8x8x8xbf16>
    %28 = tpu.concatenate %19, %20, %21, %22, %23, %24, %25, %26, %27 in 2 : vector<8x8x8xbf16>, vector<8x8x8xbf16>, vector<8x8x8xbf16>, vector<8x8x8xbf16>, vector<8x8x8xbf16>, vector<8x8x8xbf16>, vector<8x8x8xbf16>, vector<8x8x8xbf16>, vector<8x8x8xbf16> -> vector<8x8x72xbf16>
    %29 = vector.shape_cast %28 : vector<8x8x72xbf16> to vector<64x72xbf16>
    %c0_13 = arith.constant 0 : index
    %c0_14 = arith.constant 0 : index
    %30 = vector.load %arg2[%c0_13, %c0_14] : memref<72x8xbf16, #tpu.memory_space<vmem>>, vector<72x8xbf16>
    %cst_15 = arith.constant dense<0.000000e+00> : vector<64x8xf32>
    %31 = tpu.matmul %29, %30, %cst_15 {dimension_numbers = #tpu.dot_dimension_numbers<[1], [0], [0], [1], [0, 0, 1, 1], [], []>} : vector<64x72xbf16>, vector<72x8xbf16>, vector<64x8xf32> -> vector<64x8xf32>
    %32 = vector.shape_cast %31 : vector<64x8xf32> to vector<8x8x8xf32>
    %33 = arith.truncf %32 : vector<8x8x8xf32> to vector<8x8x8xbf16>
    %c0_16 = arith.constant 0 : index
    %c0_17 = arith.constant 0 : index
    %c0_18 = arith.constant 0 : index
    %c0_19 = arith.constant 0 : index
    %34 = vector.load %arg5[%c0_16, %c0_17, %c0_18, %c0_19] : memref<1x8x8x8xbf16, #tpu.memory_space<vmem>>, vector<1x8x8x8xbf16>
    %35 = vector.shape_cast %34 : vector<1x8x8x8xbf16> to vector<8x8x8xbf16>
    %36 = vector.shape_cast %33 : vector<8x8x8xbf16> to vector<1x8x8x8xbf16>
    tpu.vector_store %arg5[%c0_16, %c0_17, %c0_18, %c0_19], %36 {strides = array<i32>} : memref<1x8x8x8xbf16, #tpu.memory_space<vmem>>, vector<1x8x8x8xbf16>,
    %c0_20 = arith.constant 0 : index
    %c0_21 = arith.constant 0 : index
    %37 = vector.load %arg6[%c0_20, %c0_21] : memref<1x8xf32, #tpu.memory_space<vmem>>, vector<1x8xf32>
    %cst_22 = arith.constant dense<0.000000e+00> : vector<8xf32>
    %38 = vector.multi_reduction <add>, %31, %cst_22 [0] : vector<64x8xf32> to vector<8xf32>
    %39 = vector.shape_cast %38 : vector<8xf32> to vector<1x8xf32>
    %40 = arith.addf %37, %39 : vector<1x8xf32>
    %c0_23 = arith.constant 0 : index
    %c0_24 = arith.constant 0 : index
    %41 = vector.load %arg6[%c0_23, %c0_24] : memref<1x8xf32, #tpu.memory_space<vmem>>, vector<1x8xf32>
    tpu.vector_store %arg6[%c0_23, %c0_24], %40 {strides = array<i32>} : memref<1x8xf32, #tpu.memory_space<vmem>>, vector<1x8xf32>,
    %c0_25 = arith.constant 0 : index
    %c0_26 = arith.constant 0 : index
    %42 = vector.load %arg7[%c0_25, %c0_26] : memref<1x8xf32, #tpu.memory_space<vmem>>, vector<1x8xf32>
    %43 = arith.mulf %31, %31 : vector<64x8xf32>
    %cst_27 = arith.constant dense<0.000000e+00> : vector<8xf32>
    %44 = vector.multi_reduction <add>, %43, %cst_27 [0] : vector<64x8xf32> to vector<8xf32>
    %45 = vector.shape_cast %44 : vector<8xf32> to vector<1x8xf32>
    %46 = arith.addf %42, %45 : vector<1x8xf32>
    %c0_28 = arith.constant 0 : index
    %c0_29 = arith.constant 0 : index
    %47 = vector.load %arg7[%c0_28, %c0_29] : memref<1x8xf32, #tpu.memory_space<vmem>>, vector<1x8xf32>
    tpu.vector_store %arg7[%c0_28, %c0_29], %46 {strides = array<i32>} : memref<1x8xf32, #tpu.memory_space<vmem>>, vector<1x8xf32>,
    return
  }
  func.func @transform_0(%arg0: i32) -> (i32, i32, i32, i32) {
    %c0_i32 = arith.constant 0 : i32
    %c0_i32_0 = arith.constant 0 : i32
    %c0_i32_1 = arith.constant 0 : i32
    %c0_i32_2 = arith.constant 0 : i32
    return %arg0, %c0_i32, %c0_i32_0, %c0_i32_1 : i32, i32, i32, i32
  }
  func.func @transform_1(%arg0: i32) -> (i32, i32) {
    %c0_i32 = arith.constant 0 : i32
    %c0_i32_0 = arith.constant 0 : i32
    %c0_i32_1 = arith.constant 0 : i32
    return %c0_i32, %c0_i32_0 : i32, i32
  }
  func.func @transform_2(%arg0: i32) -> (i32, i32) {
    %c0_i32 = arith.constant 0 : i32
    %c0_i32_0 = arith.constant 0 : i32
    %c0_i32_1 = arith.constant 0 : i32
    return %c0_i32, %c0_i32_0 : i32, i32
  }
  func.func @transform_3(%arg0: i32) -> (i32, i32) {
    %c0_i32 = arith.constant 0 : i32
    %c0_i32_0 = arith.constant 0 : i32
    %c0_i32_1 = arith.constant 0 : i32
    return %c0_i32, %c0_i32_0 : i32, i32
  }
  func.func @transform_4(%arg0: i32) -> (i32, i32, i32, i32) {
    %c0_i32 = arith.constant 0 : i32
    %c0_i32_0 = arith.constant 0 : i32
    %c0_i32_1 = arith.constant 0 : i32
    %c0_i32_2 = arith.constant 0 : i32
    return %arg0, %c0_i32, %c0_i32_0, %c0_i32_1 : i32, i32, i32, i32
  }
  func.func @transform_5(%arg0: i32) -> (i32, i32) {
    %c0_i32 = arith.constant 0 : i32
    %c0_i32_0 = arith.constant 0 : i32
    %c0_i32_1 = arith.constant 0 : i32
    return %c0_i32, %c0_i32_0 : i32, i32
  }
  func.func @transform_6(%arg0: i32) -> (i32, i32) {
    %c0_i32 = arith.constant 0 : i32
    %c0_i32_0 = arith.constant 0 : i32
    %c0_i32_1 = arith.constant 0 : i32
    return %c0_i32, %c0_i32_0 : i32, i32
  }
}

</mosaic_0001>

<llo_original>
// kernel: down_forward.5
$region0: #{down_forward.5}
  #allocation0 [shape = 'u32[]', space=smem, size = 0x4, offset = 0x4, fixed_abs, tag = 'smem constant byte address 0x4 - core index']
  #allocation1 [shape = 'u32[144,128]{1,0:T(1,128)}', space=vmem, size = 0x12000, scoped, tag = 'internal scratch']
  %s0 = inlined_call_operand.vmem [shape: bf16[2,8,8,8], index: 0, kind: input, shape index: {}]
  %s1 = inlined_call_operand.vmem [shape: f32[1,8], index: 1, kind: input, shape index: {}]
  %s2 = inlined_call_operand.vmem [shape: f32[1,8], index: 2, kind: input, shape index: {}]
  %s3 = inlined_call_operand.vmem [shape: f32[2,8,8,8], index: 3, kind: output, shape index: {}]
  %s4 = sld [smem:[#allocation0]]
  $region45: #{down_forward.5} parent=0
    _
  %s6 = ssub.s32 1, %s4
  %s7 = scalar_select 0, %s6, %s4
  loop: start=0, step=1, limit=4
  $region2: #{down_forward.5} parent=0 // loop_pre_header
    _
  $region3: #{down_forward.5} parent=0 // loop_header
    %s9 = sphi 0, %s13
    %p10 = scmp.ge.s32.totalorder %s9, 4
    %s19 = sphi 0, %s21
    %s22 = sphi 0, %s19
    %s23 = sphi 0, %s22
    %s39 = sphi 0, %s23
    %s43 = sphi 0, %s43
    %s45 = sphi 0, %s43
    %s46 = sphi 0, %s45
    %s60 = sphi 0, %s46
    %s64 = sphi 0, %s64
    %s66 = sphi 0, %s64
    %s67 = sphi 0, %s66
    %s81 = sphi 0, %s67
    %s87 = sphi 0, %s89
    %s90 = sphi 0, %s87
    %s91 = sphi 0, %s90
    %s107 = sphi 0, %s91
  $region4: #{down_forward.5} parent=0 // loop_header_branch
    %12 = sbr.rel (%p10) target = $region8
  $region5: #{down_forward.5} parent=0 // loop_body
    %s14 = ssub.s32 %s9, 1
    %s15 = ssub.s32 %s9, 2
    %s16 = sadd.s32 %s9, 1
    %s17 = ssub.s32 %s9, %s16
    %p18 = scmp.eq.s32.totalorder %s17, 0
    %s20 = sadd.s32 %s19, 1
    %s21 = scalar_select %p18, %s19, %s20
    %p24 = pneg %p18
    %p25 = scmp.eq.s32.totalorder %s9, 1
    %p26 = por %p24, %p25
    %p27 = scmp.ne.s32.totalorder %s19, %s22
    %p28 = scmp.eq.s32.totalorder %s9, 0
    %p29 = por %p27, %p28
    %p30 = scmp.ne.s32.totalorder %s19, %s22
    %p31 = scmp.eq.s32.totalorder %s14, 1
    %p32 = por %p30, %p31
    %p33 = scmp.ne.s32.totalorder %s22, %s23
    %p34 = scmp.eq.s32.totalorder %s14, 0
    %p35 = por %p33, %p34
    %p36 = scmp.ne.s32.totalorder %s22, %s23
    %p37 = scmp.eq.s32.totalorder %s15, 1
    %p38 = por %p36, %p37
    %p40 = scmp.ne.s32.totalorder %s23, %s39
    %p41 = scmp.eq.s32.totalorder %s15, 0
    %p42 = por %p40, %p41
    %s44 = sadd.s32 %s43, 1
    %p47 = scmp.eq.s32.totalorder %s9, 1
    %p48 = scmp.ne.s32.totalorder %s43, %s45
    %p49 = scmp.eq.s32.totalorder %s9, 0
    %p50 = por %p48, %p49
    %p51 = scmp.ne.s32.totalorder %s43, %s45
    %p52 = scmp.eq.s32.totalorder %s14, 1
    %p53 = por %p51, %p52
    %p54 = scmp.ne.s32.totalorder %s45, %s46
    %p55 = scmp.eq.s32.totalorder %s14, 0
    %p56 = por %p54, %p55
    %p57 = scmp.ne.s32.totalorder %s45, %s46
    %p58 = scmp.eq.s32.totalorder %s15, 1
    %p59 = por %p57, %p58
    %p61 = scmp.ne.s32.totalorder %s46, %s60
    %p62 = scmp.eq.s32.totalorder %s15, 0
    %p63 = por %p61, %p62
    %s65 = sadd.s32 %s64, 1
    %p68 = scmp.eq.s32.totalorder %s9, 1
    %p69 = scmp.ne.s32.totalorder %s64, %s66
    %p70 = scmp.eq.s32.totalorder %s9, 0
    %p71 = por %p69, %p70
    %p72 = scmp.ne.s32.totalorder %s64, %s66
    %p73 = scmp.eq.s32.totalorder %s14, 1
    %p74 = por %p72, %p73
    %p75 = scmp.ne.s32.totalorder %s66, %s67
    %p76 = scmp.eq.s32.totalorder %s14, 0
    %p77 = por %p75, %p76
    %p78 = scmp.ne.s32.totalorder %s66, %s67
    %p79 = scmp.eq.s32.totalorder %s15, 1
    %p80 = por %p78, %p79
    %p82 = scmp.ne.s32.totalorder %s67, %s81
    %p83 = scmp.eq.s32.totalorder %s15, 0
    %p84 = por %p82, %p83
    %s85 = ssub.s32 %s9, %s16
    %p86 = scmp.eq.s32.totalorder %s85, 0
    %s88 = sadd.s32 %s87, 1
    %s89 = scalar_select %p86, %s87, %s88
    %p92 = pneg %p86
    %p93 = scmp.eq.s32.totalorder %s9, 1
    %p94 = por %p92, %p93
    %p95 = scmp.ne.s32.totalorder %s87, %s90
    %p96 = scmp.eq.s32.totalorder %s9, 0
    %p97 = por %p95, %p96
    %p98 = scmp.ne.s32.totalorder %s87, %s90
    %p99 = scmp.eq.s32.totalorder %s14, 1
    %p100 = por %p98, %p99
    %p101 = scmp.ne.s32.totalorder %s90, %s91
    %p102 = scmp.eq.s32.totalorder %s14, 0
    %p103 = por %p101, %p102
    %p104 = scmp.ne.s32.totalorder %s90, %s91
    %p105 = scmp.eq.s32.totalorder %s15, 1
    %p106 = por %p104, %p105
    %p108 = scmp.ne.s32.totalorder %s91, %s107
    %p109 = scmp.eq.s32.totalorder %s15, 0
    %p110 = por %p108, %p109
    %p111 = scmp.le.s32.totalorder 1, %s9
    %p112 = scmp.lt.s32.totalorder %s9, 3
    %p113 = pnand %p111, %p112
    %p114 = pneg %p113
    // Predicated region
    $region9: #{down_forward.5} parent=5 // pred_check
      _
    $region10: #{down_forward.5} parent=5 // pred_check_branch
      %116 = sbr.rel (%p113) target = $region12
    $region11: #{down_forward.5} parent=5 // pred_region
      %s117 = ssub.s32 %s9, 1
      // Predicated region
      $region13: #{down_forward.5} parent=11 // pred_check
        %p118 = pneg %p56
      $region14: #{down_forward.5} parent=11 // pred_check_branch
        %120 = sbr.rel (%p118) target = $region16
      $region15: #{down_forward.5} parent=11 // pred_region
        _
      $region16: #{down_forward.5} parent=11 // pred_fallthru
        _
      // Predicated region
      $region17: #{down_forward.5} parent=11 // pred_check
        %p121 = pneg %p77
      $region18: #{down_forward.5} parent=11 // pred_check_branch
        %123 = sbr.rel (%p121) target = $region20
      $region19: #{down_forward.5} parent=11 // pred_region
        _
      $region20: #{down_forward.5} parent=11 // pred_fallthru
        _
    $region12: #{down_forward.5} parent=5 // pred_fallthru
      _
    %p124 = scmp.lt.s32.totalorder %s9, 2
    // Predicated region
    $region21: #{down_forward.5} parent=5 // pred_check
      %p125 = pneg %p124
    $region22: #{down_forward.5} parent=5 // pred_check_branch
      %127 = sbr.rel (%p125) target = $region24
    $region23: #{down_forward.5} parent=5 // pred_region
      // Predicated region
      $region25: #{down_forward.5} parent=23 // pred_check
        %p128 = pneg %p29
      $region26: #{down_forward.5} parent=23 // pred_check_branch
        %130 = sbr.rel (%p128) target = $region28
      $region27: #{down_forward.5} parent=23 // pred_region
        %p131 = scmp.lt.s32.totalorder %s9, 1
        %s132 = scalar_select %p131, %s9, 1
        %s133 = smul.addr %s132, 8
        %s134 = smul.addr %s133, 4
        %s135 = scalar_lea.vmem %s0, %s134
      $region28: #{down_forward.5} parent=23 // pred_fallthru
        _
    $region24: #{down_forward.5} parent=5 // pred_fallthru
      _
    %p136 = scmp.le.s32.totalorder 1, %s9
    %p137 = scmp.lt.s32.totalorder %s9, 3
    %p138 = pnand %p136, %p137
    %p139 = pneg %p138
    // Predicated region
    $region29: #{down_forward.5} parent=5 // pred_check
      _
    $region30: #{down_forward.5} parent=5 // pred_check_branch
      %141 = sbr.rel (%p138) target = $region32
    $region31: #{down_forward.5} parent=5 // pred_region
      %s142 = ssub.s32 %s9, 1
      %p143 = scmp.lt.s32.totalorder %s14, 1
      %s144 = scalar_select %p143, %s14, 1
      %s145 = smul.addr %s144, 8
      %s146 = smul.addr %s145, 4
      %s147 = scalar_lea.vmem %s0, %s146
      %p148 = pneg %p35
      %p149 = pneg %p32
      %p150 = pneg %p56
      %p151 = pneg %p53
      %p152 = pneg %p77
      %p153 = pneg %p74
      %p154 = pneg %p103
      %p155 = pneg %p100
      %p156 = scmp.lt.s32.totalorder %s14, 1
      %s157 = scalar_select %p156, %s14, 1
      %s158 = smul.addr %s157, 8
      %s159 = smul.addr %s158, 8
      %s160 = scalar_lea.vmem %s3, %s159
      %p161 = scmp.lt.s32.totalorder %s14, 1
      %s162 = scalar_select %p161, %s14, 1
      %s163 = smul.addr %s162, 8
      %s164 = smul.addr %s163, 4
      %s165 = scalar_lea.vmem %s0, %s164
      %p166 = scmp.lt.s32.totalorder %s14, 1
      %s167 = scalar_select %p166, %s14, 1
      %s168 = smul.addr %s167, 8
      %s169 = smul.addr %s168, 8
      %s170 = scalar_lea.vmem %s3, %s169
      %v171 = vld [vmem:[%s165] sm:$0xf]
      %v172 = vld [vmem:[%s165 + $0x4] sm:$0xf]
      %v173 = vld [vmem:[%s165 + $0x8] sm:$0xf]
      %v174 = vld [vmem:[%s165 + $0xc] sm:$0xf]
      %v175 = vld [vmem:[%s165 + $0x10] sm:$0xf]
      %v176 = vld [vmem:[%s165 + $0x14] sm:$0xf]
      %v177 = vld [vmem:[%s165 + $0x18] sm:$0xf]
      %v178 = vld [vmem:[%s165 + $0x1c] sm:$0xf]
      %v179 = vunpack.c.l.bf16 %v171
      %v180 = vunpack.c.l.bf16 %v172
      %v181 = vunpack.c.l.bf16 %v173
      %v182 = vunpack.c.l.bf16 %v174
      %v183 = vunpack.c.l.bf16 %v175
      %v184 = vunpack.c.l.bf16 %v176
      %v185 = vunpack.c.l.bf16 %v177
      %v186 = vunpack.c.l.bf16 %v178
      %v187 = vld [vmem:[%s1] sm:$0x1]
      %v189 = vlaneseq
      %v190 = vshrl.u32 %v189, 7
      %v191 = vsub.s32 0, %v190
      %v192 = vrot.slane %v187, %v191
      %v194 = vmul.f32 %v179, %v192
      %v195 = vmul.f32 %v180, %v192
      %v196 = vmul.f32 %v181, %v192
      %v197 = vmul.f32 %v182, %v192
      %v198 = vmul.f32 %v183, %v192
      %v199 = vmul.f32 %v184, %v192
      %v200 = vmul.f32 %v185, %v192
      %v201 = vmul.f32 %v186, %v192
      %v202 = vld [vmem:[%s2] sm:$0x1]
      %v204 = vlaneseq
      %v205 = vshrl.u32 %v204, 7
      %v206 = vsub.s32 0, %v205
      %v207 = vrot.slane %v202, %v206
      %v209 = vadd.f32 %v194, %v207
      %v210 = vadd.f32 %v195, %v207
      %v211 = vadd.f32 %v196, %v207
      %v212 = vadd.f32 %v197, %v207
      %v213 = vadd.f32 %v198, %v207
      %v214 = vadd.f32 %v199, %v207
      %v215 = vadd.f32 %v200, %v207
      %v216 = vadd.f32 %v201, %v207
      %v217 = vmax.f32 %v209, 0.0
      %v218 = vmax.f32 %v210, 0.0
      %v219 = vmax.f32 %v211, 0.0
      %v220 = vmax.f32 %v212, 0.0
      %v221 = vmax.f32 %v213, 0.0
      %v222 = vmax.f32 %v214, 0.0
      %v223 = vmax.f32 %v215, 0.0
      %v224 = vmax.f32 %v216, 0.0
      %vm225 = vcmask 64512
      %226 = vst.msk [vmem:[%s170] sm:$0xff] %vm225, %v217
      %227 = vst.msk [vmem:[%s170 + $0x8] sm:$0xff] %vm225, %v218
      %228 = vst.msk [vmem:[%s170 + $0x10] sm:$0xff] %vm225, %v219
      %229 = vst.msk [vmem:[%s170 + $0x18] sm:$0xff] %vm225, %v220
      %230 = vst.msk [vmem:[%s170 + $0x20] sm:$0xff] %vm225, %v221
      %231 = vst.msk [vmem:[%s170 + $0x28] sm:$0xff] %vm225, %v222
      %232 = vst.msk [vmem:[%s170 + $0x30] sm:$0xff] %vm225, %v223
      %233 = vst.msk [vmem:[%s170 + $0x38] sm:$0xff] %vm225, %v224
      %p234 = scmp.lt.s32.totalorder %s14, 1
      %s235 = scalar_select %p234, %s14, 1
      %s236 = smul.addr %s235, 8
      %s237 = smul.addr %s236, 8
      %s238 = scalar_lea.vmem %s3, %s237
      // Predicated region
      $region33: #{down_forward.5} parent=31 // pred_check
        %p239 = pneg %p100
      $region34: #{down_forward.5} parent=31 // pred_check_branch
        %241 = sbr.rel (%p239) target = $region36
      $region35: #{down_forward.5} parent=31 // pred_region
        _
      $region36: #{down_forward.5} parent=31 // pred_fallthru
        _
    $region32: #{down_forward.5} parent=5 // pred_fallthru
      _
    %p242 = scmp.le.s32.totalorder 2, %s9
    // Predicated region
    $region37: #{down_forward.5} parent=5 // pred_check
      %p243 = pneg %p242
    $region38: #{down_forward.5} parent=5 // pred_check_branch
      %245 = sbr.rel (%p243) target = $region40
    $region39: #{down_forward.5} parent=5 // pred_region
      %s246 = ssub.s32 %s9, 2
      // Predicated region
      $region41: #{down_forward.5} parent=39 // pred_check
        %p247 = pneg %p106
      $region42: #{down_forward.5} parent=39 // pred_check_branch
        %249 = sbr.rel (%p247) target = $region44
      $region43: #{down_forward.5} parent=39 // pred_region
        %p250 = scmp.lt.s32.totalorder %s15, 1
        %s251 = scalar_select %p250, %s15, 1
        %s252 = smul.addr %s251, 8
        %s253 = smul.addr %s252, 8
        %s254 = scalar_lea.vmem %s3, %s253
      $region44: #{down_forward.5} parent=39 // pred_fallthru
        _
    $region40: #{down_forward.5} parent=5 // pred_fallthru
      _
  $region6: #{down_forward.5} parent=0 // loop_footer
    %s13 = sadd.s32 1, %s9
  $region7: #{down_forward.5} parent=0 // loop_footer_branch
    %8 = sbr.rel target = $region3
  $region8: #{down_forward.5} parent=0 // loop_exit
    _

// kernel: down_forward.3
$region0: #{down_forward.3}
  #allocation0 [shape = 'u32[]', space=smem, size = 0x4, offset = 0x4, fixed_abs, tag = 'smem constant byte address 0x4 - core index']
  #allocation1 [shape = 'u32[144,128]{1,0:T(1,128)}', space=vmem, size = 0x12000, scoped, tag = 'internal scratch']
  %s0 = inlined_call_operand.vmem [shape: bf16[2,10,10,4], index: 0, kind: input, shape index: {}]
  %s1 = inlined_call_operand.vmem [shape: bf16[36,8], index: 1, kind: input, shape index: {}]
  %s2 = inlined_call_operand.vmem [shape: bf16[2,8,8,8], index: 2, kind: output, shape index: {0}]
  %s3 = inlined_call_operand.vmem [shape: f32[1,8], index: 3, kind: output, shape index: {1}]
  %s4 = inlined_call_operand.vmem [shape: f32[1,8], index: 4, kind: output, shape index: {2}]
  %5 = xla_tuple %s2, %s3, %s4
  %s6 = sld [smem:[#allocation0]]
  $region61: #{down_forward.3} parent=0
    _
  %s8 = ssub.s32 1, %s6
  %s9 = scalar_select 0, %s8, %s6
  loop: start=0, step=1, limit=4
  $region2: #{down_forward.3} parent=0 // loop_pre_header
    _
  $region3: #{down_forward.3} parent=0 // loop_header
    %s11 = sphi 0, %s15
    %p12 = scmp.ge.s32.totalorder %s11, 4
    %s21 = sphi 0, %s23
    %s24 = sphi 0, %s21
    %s25 = sphi 0, %s24
    %s41 = sphi 0, %s25
    %s45 = sphi 0, %s45
    %s47 = sphi 0, %s45
    %s48 = sphi 0, %s47
    %s62 = sphi 0, %s48
    %s68 = sphi 0, %s70
    %s71 = sphi 0, %s68
    %s72 = sphi 0, %s71
    %s88 = sphi 0, %s72
    %s92 = sphi 0, %s92
    %s94 = sphi 0, %s92
    %s95 = sphi 0, %s94
    %s109 = sphi 0, %s95
    %s113 = sphi 0, %s113
    %s115 = sphi 0, %s113
    %s116 = sphi 0, %s115
    %s130 = sphi 0, %s116
  $region4: #{down_forward.3} parent=0 // loop_header_branch
    %14 = sbr.rel (%p12) target = $region8
  $region5: #{down_forward.3} parent=0 // loop_body
    %s16 = ssub.s32 %s11, 1
    %s17 = ssub.s32 %s11, 2
    %s18 = sadd.s32 %s11, 1
    %s19 = ssub.s32 %s11, %s18
    %p20 = scmp.eq.s32.totalorder %s19, 0
    %s22 = sadd.s32 %s21, 1
    %s23 = scalar_select %p20, %s21, %s22
    %p26 = pneg %p20
    %p27 = scmp.eq.s32.totalorder %s11, 1
    %p28 = por %p26, %p27
    %p29 = scmp.ne.s32.totalorder %s21, %s24
    %p30 = scmp.eq.s32.totalorder %s11, 0
    %p31 = por %p29, %p30
    %p32 = scmp.ne.s32.totalorder %s21, %s24
    %p33 = scmp.eq.s32.totalorder %s16, 1
    %p34 = por %p32, %p33
    %p35 = scmp.ne.s32.totalorder %s24, %s25
    %p36 = scmp.eq.s32.totalorder %s16, 0
    %p37 = por %p35, %p36
    %p38 = scmp.ne.s32.totalorder %s24, %s25
    %p39 = scmp.eq.s32.totalorder %s17, 1
    %p40 = por %p38, %p39
    %p42 = scmp.ne.s32.totalorder %s25, %s41
    %p43 = scmp.eq.s32.totalorder %s17, 0
    %p44 = por %p42, %p43
    %s46 = sadd.s32 %s45, 1
    %p49 = scmp.eq.s32.totalorder %s11, 1
    %p50 = scmp.ne.s32.totalorder %s45, %s47
    %p51 = scmp.eq.s32.totalorder %s11, 0
    %p52 = por %p50, %p51
    %p53 = scmp.ne.s32.totalorder %s45, %s47
    %p54 = scmp.eq.s32.totalorder %s16, 1
    %p55 = por %p53, %p54
    %p56 = scmp.ne.s32.totalorder %s47, %s48
    %p57 = scmp.eq.s32.totalorder %s16, 0
    %p58 = por %p56, %p57
    %p59 = scmp.ne.s32.totalorder %s47, %s48
    %p60 = scmp.eq.s32.totalorder %s17, 1
    %p61 = por %p59, %p60
    %p63 = scmp.ne.s32.totalorder %s48, %s62
    %p64 = scmp.eq.s32.totalorder %s17, 0
    %p65 = por %p63, %p64
    %s66 = ssub.s32 %s11, %s18
    %p67 = scmp.eq.s32.totalorder %s66, 0
    %s69 = sadd.s32 %s68, 1
    %s70 = scalar_select %p67, %s68, %s69
    %p73 = pneg %p67
    %p74 = scmp.eq.s32.totalorder %s11, 1
    %p75 = por %p73, %p74
    %p76 = scmp.ne.s32.totalorder %s68, %s71
    %p77 = scmp.eq.s32.totalorder %s11, 0
    %p78 = por %p76, %p77
    %p79 = scmp.ne.s32.totalorder %s68, %s71
    %p80 = scmp.eq.s32.totalorder %s16, 1
    %p81 = por %p79, %p80
    %p82 = scmp.ne.s32.totalorder %s71, %s72
    %p83 = scmp.eq.s32.totalorder %s16, 0
    %p84 = por %p82, %p83
    %p85 = scmp.ne.s32.totalorder %s71, %s72
    %p86 = scmp.eq.s32.totalorder %s17, 1
    %p87 = por %p85, %p86
    %p89 = scmp.ne.s32.totalorder %s72, %s88
    %p90 = scmp.eq.s32.totalorder %s17, 0
    %p91 = por %p89, %p90
    %s93 = sadd.s32 %s92, 1
    %p96 = scmp.eq.s32.totalorder %s11, 1
    %p97 = scmp.ne.s32.totalorder %s92, %s94
    %p98 = scmp.eq.s32.totalorder %s11, 0
    %p99 = por %p97, %p98
    %p100 = scmp.ne.s32.totalorder %s92, %s94
    %p101 = scmp.eq.s32.totalorder %s16, 1
    %p102 = por %p100, %p101
    %p103 = scmp.ne.s32.totalorder %s94, %s95
    %p104 = scmp.eq.s32.totalorder %s16, 0
    %p105 = por %p103, %p104
    %p106 = scmp.ne.s32.totalorder %s94, %s95
    %p107 = scmp.eq.s32.totalorder %s17, 1
    %p108 = por %p106, %p107
    %p110 = scmp.ne.s32.totalorder %s95, %s109
    %p111 = scmp.eq.s32.totalorder %s17, 0
    %p112 = por %p110, %p111
    %s114 = sadd.s32 %s113, 1
    %p117 = scmp.eq.s32.totalorder %s11, 1
    %p118 = scmp.ne.s32.totalorder %s113, %s115
    %p119 = scmp.eq.s32.totalorder %s11, 0
    %p120 = por %p118, %p119
    %p121 = scmp.ne.s32.totalorder %s113, %s115
    %p122 = scmp.eq.s32.totalorder %s16, 1
    %p123 = por %p121, %p122
    %p124 = scmp.ne.s32.totalorder %s115, %s116
    %p125 = scmp.eq.s32.totalorder %s16, 0
    %p126 = por %p124, %p125
    %p127 = scmp.ne.s32.totalorder %s115, %s116
    %p128 = scmp.eq.s32.totalorder %s17, 1
    %p129 = por %p127, %p128
    %p131 = scmp.ne.s32.totalorder %s116, %s130
    %p132 = scmp.eq.s32.totalorder %s17, 0
    %p133 = por %p131, %p132
    %p134 = scmp.le.s32.totalorder 1, %s11
    %p135 = scmp.lt.s32.totalorder %s11, 3
    %p136 = pnand %p134, %p135
    %p137 = pneg %p136
    // Predicated region
    $region9: #{down_forward.3} parent=5 // pred_check
      _
    $region10: #{down_forward.3} parent=5 // pred_check_branch
      %139 = sbr.rel (%p136) target = $region12
    $region11: #{down_forward.3} parent=5 // pred_region
      %s140 = ssub.s32 %s11, 1
      // Predicated region
      $region13: #{down_forward.3} parent=11 // pred_check
        %p141 = pneg %p58
      $region14: #{down_forward.3} parent=11 // pred_check_branch
        %143 = sbr.rel (%p141) target = $region16
      $region15: #{down_forward.3} parent=11 // pred_region
        _
      $region16: #{down_forward.3} parent=11 // pred_fallthru
        _
    $region12: #{down_forward.3} parent=5 // pred_fallthru
      _
    %p144 = scmp.lt.s32.totalorder %s11, 2
    // Predicated region
    $region17: #{down_forward.3} parent=5 // pred_check
      %p145 = pneg %p144
    $region18: #{down_forward.3} parent=5 // pred_check_branch
      %147 = sbr.rel (%p145) target = $region20
    $region19: #{down_forward.3} parent=5 // pred_region
      // Predicated region
      $region21: #{down_forward.3} parent=19 // pred_check
        %p148 = pneg %p31
      $region22: #{down_forward.3} parent=19 // pred_check_branch
        %150 = sbr.rel (%p148) target = $region24
      $region23: #{down_forward.3} parent=19 // pred_region
        %p151 = scmp.lt.s32.totalorder %s11, 1
        %s152 = scalar_select %p151, %s11, 1
        %s153 = smul.addr %s152, 20
        %s154 = smul.addr %s153, 4
        %s155 = scalar_lea.vmem %s0, %s154
      $region24: #{down_forward.3} parent=19 // pred_fallthru
        _
    $region20: #{down_forward.3} parent=5 // pred_fallthru
      _
    %p156 = scmp.le.s32.totalorder 1, %s11
    %p157 = scmp.lt.s32.totalorder %s11, 3
    %p158 = pnand %p156, %p157
    %p159 = pneg %p158
    // Predicated region
    $region25: #{down_forward.3} parent=5 // pred_check
      _
    $region26: #{down_forward.3} parent=5 // pred_check_branch
      %161 = sbr.rel (%p158) target = $region28
    $region27: #{down_forward.3} parent=5 // pred_region
      %s162 = ssub.s32 %s11, 1
      %p163 = scmp.lt.s32.totalorder %s16, 1
      %s164 = scalar_select %p163, %s16, 1
      %s165 = smul.addr %s164, 20
      %s166 = smul.addr %s165, 4
      %s167 = scalar_lea.vmem %s0, %s166
      %p168 = pneg %p37
      %p169 = pneg %p34
      %p170 = pneg %p58
      %p171 = pneg %p55
      %p172 = pneg %p84
      %p173 = pneg %p81
      %p174 = scmp.lt.s32.totalorder %s16, 1
      %s175 = scalar_select %p174, %s16, 1
      %s176 = smul.addr %s175, 8
      %s177 = smul.addr %s176, 4
      %s178 = scalar_lea.vmem %s2, %s177
      %p179 = pneg %p105
      %p180 = pneg %p102
      %p181 = pneg %p126
      %p182 = pneg %p123
      %p183 = scmp.lt.s32.totalorder %s16, 1
      %s184 = scalar_select %p183, %s16, 1
      %s185 = smul.addr %s184, 20
      %s186 = smul.addr %s185, 4
      %s187 = scalar_lea.vmem %s0, %s186
      %p188 = scmp.lt.s32.totalorder %s16, 1
      %s189 = scalar_select %p188, %s16, 1
      %s190 = smul.addr %s189, 8
      %s191 = smul.addr %s190, 4
      %s192 = scalar_lea.vmem %s2, %s191
      %p194 = scmp.eq.s32.totalorder %s16, 0
      // Predicated region
      $region29: #{down_forward.3} parent=27 // pred_check
        %p195 = pneg %p194
      $region30: #{down_forward.3} parent=27 // pred_check_branch
        %197 = sbr.rel (%p195) target = $region32
      $region31: #{down_forward.3} parent=27 // pred_region
        %vm198 = vcmask 57344
        %199 = vst.msk [vmem:[%s3] sm:$0x1] %vm198, 0.0
        %200 = vst.msk [vmem:[%s4] sm:$0x1] %vm198, 0.0
      $region32: #{down_forward.3} parent=27 // pred_fallthru
        _
      %v201 = vld [vmem:[%s187] sm:$0xf]
      %v202 = vld [vmem:[%s187 + $0x4] sm:$0x1]
      %v203 = vld [vmem:[%s187 + $0x8] sm:$0xf]
      %v204 = vld [vmem:[%s187 + $0xc] sm:$0x1]
      %v205 = vld [vmem:[%s187 + $0x10] sm:$0xf]
      %v206 = vld [vmem:[%s187 + $0x14] sm:$0x1]
      %v207 = vld [vmem:[%s187 + $0x18] sm:$0xf]
      %v208 = vld [vmem:[%s187 + $0x1c] sm:$0x1]
      %v209 = vld [vmem:[%s187 + $0x20] sm:$0xf]
      %v210 = vld [vmem:[%s187 + $0x24] sm:$0x1]
      %v211 = vld [vmem:[%s187 + $0x28] sm:$0xf]
      %v212 = vld [vmem:[%s187 + $0x2c] sm:$0x1]
      %v213 = vld [vmem:[%s187 + $0x30] sm:$0xf]
      %v214 = vld [vmem:[%s187 + $0x34] sm:$0x1]
      %v215 = vld [vmem:[%s187 + $0x38] sm:$0xf]
      %v216 = vld [vmem:[%s187 + $0x3c] sm:$0x1]
      %v217 = vld [vmem:[%s187 + $0x40] sm:$0xf]
      %v218 = vld [vmem:[%s187 + $0x44] sm:$0x1]
      %v219 = vld [vmem:[%s187 + $0x48] sm:$0xf]
      %v220 = vld [vmem:[%s187 + $0x4c] sm:$0x1]
      %v237 = vunpack.c.l.b16 %v201
      %v238 = vunpack.c.l.b16 %v202
      %v239 = vunpack.c.l.b16 %v203
      %v240 = vunpack.c.l.b16 %v204
      %v241 = vunpack.c.l.b16 %v205
      %v242 = vunpack.c.l.b16 %v206
      %v243 = vunpack.c.l.b16 %v207
      %v244 = vunpack.c.l.b16 %v208
      %v245 = vunpack.c.l.b16 %v209
      %v246 = vunpack.c.l.b16 %v210
      %v247 = vunpack.c.l.b16 %v211
      %v248 = vunpack.c.l.b16 %v212
      %v249 = vunpack.c.l.b16 %v213
      %v250 = vunpack.c.l.b16 %v214
      %v251 = vunpack.c.l.b16 %v215
      %v252 = vunpack.c.l.b16 %v216
      %v253 = vpack.c.b16 %v238, %v237
      %v254 = vpack.c.b16 %v240, %v239
      %v255 = vpack.c.b16 %v242, %v241
      %v256 = vpack.c.b16 %v244, %v243
      %v257 = vpack.c.b16 %v246, %v245
      %v258 = vpack.c.b16 %v248, %v247
      %v259 = vpack.c.b16 %v250, %v249
      %v260 = vpack.c.b16 %v252, %v251
      %v262 = vshrl.u32 %v253, 16
      %v264 = vshll.u32 %v253, 16
      %v266 = vrot.slane %v264, 1
      %v267 = vor.u32 %v262, %v266
      %v269 = vshrl.u32 %v254, 16
      %v271 = vshll.u32 %v254, 16
      %v273 = vrot.slane %v271, 1
      %v274 = vor.u32 %v269, %v273
      %v276 = vshrl.u32 %v255, 16
      %v278 = vshll.u32 %v255, 16
      %v280 = vrot.slane %v278, 1
      %v281 = vor.u32 %v276, %v280
      %v283 = vshrl.u32 %v256, 16
      %v285 = vshll.u32 %v256, 16
      %v287 = vrot.slane %v285, 1
      %v288 = vor.u32 %v283, %v287
      %v290 = vshrl.u32 %v257, 16
      %v292 = vshll.u32 %v257, 16
      %v294 = vrot.slane %v292, 1
      %v295 = vor.u32 %v290, %v294
      %v297 = vshrl.u32 %v258, 16
      %v299 = vshll.u32 %v258, 16
      %v301 = vrot.slane %v299, 1
      %v302 = vor.u32 %v297, %v301
      %v304 = vshrl.u32 %v259, 16
      %v306 = vshll.u32 %v259, 16
      %v308 = vrot.slane %v306, 1
      %v309 = vor.u32 %v304, %v308
      %v311 = vshrl.u32 %v260, 16
      %v313 = vshll.u32 %v260, 16
      %v315 = vrot.slane %v313, 1
      %v316 = vor.u32 %v311, %v315
      %317 = vrot.lane.b32.xlu0 %v267, 4
      %v318 = vpop.permute.xlu0 %317
      %319 = vrot.lane.b32.xlu0 %v274, 4
      %v320 = vpop.permute.xlu0 %319
      %321 = vrot.lane.b32.xlu0 %v281, 4
      %v322 = vpop.permute.xlu0 %321
      %323 = vrot.lane.b32.xlu0 %v288, 4
      %v324 = vpop.permute.xlu0 %323
      %325 = vrot.lane.b32.xlu0 %v295, 4
      %v326 = vpop.permute.xlu0 %325
      %327 = vrot.lane.b32.xlu0 %v302, 4
      %v328 = vpop.permute.xlu0 %327
      %329 = vrot.lane.b32.xlu0 %v309, 4
      %v330 = vpop.permute.xlu0 %329
      %331 = vrot.lane.b32.xlu0 %v316, 4
      %v332 = vpop.permute.xlu0 %331
      %v333 = vrot.slane %v253, 1
      %v334 = vrot.slane %v254, 1
      %v335 = vrot.slane %v255, 1
      %v336 = vrot.slane %v256, 1
      %v337 = vrot.slane %v257, 1
      %v338 = vrot.slane %v258, 1
      %v339 = vrot.slane %v259, 1
      %v340 = vrot.slane %v260, 1
      %341 = vrot.lane.b32.xlu0 %v333, 8
      %v342 = vpop.permute.xlu0 %341
      %343 = vrot.lane.b32.xlu0 %v334, 8
      %v344 = vpop.permute.xlu0 %343
      %345 = vrot.lane.b32.xlu0 %v335, 8
      %v346 = vpop.permute.xlu0 %345
      %347 = vrot.lane.b32.xlu0 %v336, 8
      %v348 = vpop.permute.xlu0 %347
      %349 = vrot.lane.b32.xlu0 %v337, 8
      %v350 = vpop.permute.xlu0 %349
      %351 = vrot.lane.b32.xlu0 %v338, 8
      %v352 = vpop.permute.xlu0 %351
      %353 = vrot.lane.b32.xlu0 %v339, 8
      %v354 = vpop.permute.xlu0 %353
      %355 = vrot.lane.b32.xlu0 %v340, 8
      %v356 = vpop.permute.xlu0 %355
      %v358 = vunpack.c.l.b16 %v217
      %v359 = vpack.c.b16 %v239, %v239
      %v360 = vpack.c.b16 %v241, %v241
      %v361 = vpack.c.b16 %v243, %v243
      %v362 = vpack.c.b16 %v245, %v245
      %v363 = vpack.c.b16 %v247, %v247
      %v364 = vpack.c.b16 %v249, %v249
      %v365 = vpack.c.b16 %v251, %v251
      %v366 = vpack.c.b16 %v358, %v358
      %367 = vrot.lane.b32.xlu0 %v359, 12
      %v368 = vpop.permute.xlu0 %367
      %369 = vrot.lane.b32.xlu0 %v360, 12
      %v370 = vpop.permute.xlu0 %369
      %371 = vrot.lane.b32.xlu0 %v361, 12
      %v372 = vpop.permute.xlu0 %371
      %373 = vrot.lane.b32.xlu0 %v362, 12
      %v374 = vpop.permute.xlu0 %373
      %375 = vrot.lane.b32.xlu0 %v363, 12
      %v376 = vpop.permute.xlu0 %375
      %377 = vrot.lane.b32.xlu0 %v364, 12
      %v378 = vpop.permute.xlu0 %377
      %379 = vrot.lane.b32.xlu0 %v365, 12
      %v380 = vpop.permute.xlu0 %379
      %381 = vrot.lane.b32.xlu0 %v366, 12
      %v382 = vpop.permute.xlu0 %381
      %v384 = vunpack.c.l.b16 %v218
      %v385 = vpack.c.b16 %v384, %v358
      %v387 = vshrl.u32 %v385, 16
      %v389 = vshll.u32 %v385, 16
      %v391 = vrot.slane %v389, 1
      %v392 = vor.u32 %v387, %v391
      %393 = vrot.lane.b32.xlu0 %v274, 16
      %v394 = vpop.permute.xlu0 %393
      %395 = vrot.lane.b32.xlu0 %v281, 16
      %v396 = vpop.permute.xlu0 %395
      %397 = vrot.lane.b32.xlu0 %v288, 16
      %v398 = vpop.permute.xlu0 %397
      %399 = vrot.lane.b32.xlu0 %v295, 16
      %v400 = vpop.permute.xlu0 %399
      %401 = vrot.lane.b32.xlu0 %v302, 16
      %v402 = vpop.permute.xlu0 %401
      %403 = vrot.lane.b32.xlu0 %v309, 16
      %v404 = vpop.permute.xlu0 %403
      %405 = vrot.lane.b32.xlu0 %v316, 16
      %v406 = vpop.permute.xlu0 %405
      %407 = vrot.lane.b32.xlu0 %v392, 16
      %v408 = vpop.permute.xlu0 %407
      %v409 = vrot.slane %v385, 1
      %410 = vrot.lane.b32.xlu0 %v334, 20
      %v411 = vpop.permute.xlu0 %410
      %412 = vrot.lane.b32.xlu0 %v335, 20
      %v413 = vpop.permute.xlu0 %412
      %414 = vrot.lane.b32.xlu0 %v336, 20
      %v415 = vpop.permute.xlu0 %414
      %416 = vrot.lane.b32.xlu0 %v337, 20
      %v417 = vpop.permute.xlu0 %416
      %418 = vrot.lane.b32.xlu0 %v338, 20
      %v419 = vpop.permute.xlu0 %418
      %420 = vrot.lane.b32.xlu0 %v339, 20
      %v421 = vpop.permute.xlu0 %420
      %422 = vrot.lane.b32.xlu0 %v340, 20
      %v423 = vpop.permute.xlu0 %422
      %424 = vrot.lane.b32.xlu0 %v409, 20
      %v425 = vpop.permute.xlu0 %424
      %v427 = vunpack.c.l.b16 %v219
      %v428 = vpack.c.b16 %v427, %v427
      %429 = vrot.lane.b32.xlu0 %v360, 24
      %v430 = vpop.permute.xlu0 %429
      %431 = vrot.lane.b32.xlu0 %v361, 24
      %v432 = vpop.permute.xlu0 %431
      %433 = vrot.lane.b32.xlu0 %v362, 24
      %v434 = vpop.permute.xlu0 %433
      %435 = vrot.lane.b32.xlu0 %v363, 24
      %v436 = vpop.permute.xlu0 %435
      %437 = vrot.lane.b32.xlu0 %v364, 24
      %v438 = vpop.permute.xlu0 %437
      %439 = vrot.lane.b32.xlu0 %v365, 24
      %v440 = vpop.permute.xlu0 %439
      %441 = vrot.lane.b32.xlu0 %v366, 24
      %v442 = vpop.permute.xlu0 %441
      %443 = vrot.lane.b32.xlu0 %v428, 24
      %v444 = vpop.permute.xlu0 %443
      %v446 = vunpack.c.l.b16 %v220
      %v447 = vpack.c.b16 %v446, %v427
      %v449 = vshrl.u32 %v447, 16
      %v451 = vshll.u32 %v447, 16
      %v453 = vrot.slane %v451, 1
      %v454 = vor.u32 %v449, %v453
      %455 = vrot.lane.b32.xlu0 %v281, 28
      %v456 = vpop.permute.xlu0 %455
      %457 = vrot.lane.b32.xlu0 %v288, 28
      %v458 = vpop.permute.xlu0 %457
      %459 = vrot.lane.b32.xlu0 %v295, 28
      %v460 = vpop.permute.xlu0 %459
      %461 = vrot.lane.b32.xlu0 %v302, 28
      %v462 = vpop.permute.xlu0 %461
      %463 = vrot.lane.b32.xlu0 %v309, 28
      %v464 = vpop.permute.xlu0 %463
      %465 = vrot.lane.b32.xlu0 %v316, 28
      %v466 = vpop.permute.xlu0 %465
      %467 = vrot.lane.b32.xlu0 %v392, 28
      %v468 = vpop.permute.xlu0 %467
      %469 = vrot.lane.b32.xlu0 %v454, 28
      %v470 = vpop.permute.xlu0 %469
      %v471 = vrot.slane %v447, 1
      %472 = vrot.lane.b32.xlu0 %v335, 32
      %v473 = vpop.permute.xlu0 %472
      %474 = vrot.lane.b32.xlu0 %v336, 32
      %v475 = vpop.permute.xlu0 %474
      %476 = vrot.lane.b32.xlu0 %v337, 32
      %v477 = vpop.permute.xlu0 %476
      %478 = vrot.lane.b32.xlu0 %v338, 32
      %v479 = vpop.permute.xlu0 %478
      %480 = vrot.lane.b32.xlu0 %v339, 32
      %v481 = vpop.permute.xlu0 %480
      %482 = vrot.lane.b32.xlu0 %v340, 32
      %v483 = vpop.permute.xlu0 %482
      %484 = vrot.lane.b32.xlu0 %v409, 32
      %v485 = vpop.permute.xlu0 %484
      %486 = vrot.lane.b32.xlu0 %v471, 32
      %v487 = vpop.permute.xlu0 %486
      %vm488 = vcmask 31744
      %v491 = vsel %vm488, %v201, %v318
      %v494 = vsel %vm488, %v203, %v320
      %v497 = vsel %vm488, %v205, %v322
      %v500 = vsel %vm488, %v207, %v324
      %v503 = vsel %vm488, %v209, %v326
      %v506 = vsel %vm488, %v211, %v328
      %v509 = vsel %vm488, %v213, %v330
      %v512 = vsel %vm488, %v215, %v332
      %vm513 = vcmask 64512
      %v515 = vsel %vm513, %v491, %v342
      %v517 = vsel %vm513, %v494, %v344
      %v519 = vsel %vm513, %v497, %v346
      %v521 = vsel %vm513, %v500, %v348
      %v523 = vsel %vm513, %v503, %v350
      %v525 = vsel %vm513, %v506, %v352
      %v527 = vsel %vm513, %v509, %v354
      %v529 = vsel %vm513, %v512, %v356
      %vm530 = vcmask 97280
      %v532 = vsel %vm530, %v515, %v368
      %v534 = vsel %vm530, %v517, %v370
      %v536 = vsel %vm530, %v519, %v372
      %v538 = vsel %vm530, %v521, %v374
      %v540 = vsel %vm530, %v523, %v376
      %v542 = vsel %vm530, %v525, %v378
      %v544 = vsel %vm530, %v527, %v380
      %v546 = vsel %vm530, %v529, %v382
      %vm547 = vcmask 130048
      %v549 = vsel %vm547, %v532, %v394
      %v551 = vsel %vm547, %v534, %v396
      %v553 = vsel %vm547, %v536, %v398
      %v555 = vsel %vm547, %v538, %v400
      %v557 = vsel %vm547, %v540, %v402
      %v559 = vsel %vm547, %v542, %v404
      %v561 = vsel %vm547, %v544, %v406
      %v563 = vsel %vm547, %v546, %v408
      %vm564 = vcmask 162816
      %v566 = vsel %vm564, %v549, %v411
      %v568 = vsel %vm564, %v551, %v413
      %v570 = vsel %vm564, %v553, %v415
      %v572 = vsel %vm564, %v555, %v417
      %v574 = vsel %vm564, %v557, %v419
      %v576 = vsel %vm564, %v559, %v421
      %v578 = vsel %vm564, %v561, %v423
      %v580 = vsel %vm564, %v563, %v425
      %vm581 = vcmask 195584
      %v583 = vsel %vm581, %v566, %v430
      %v585 = vsel %vm581, %v568, %v432
      %v587 = vsel %vm581, %v570, %v434
      %v589 = vsel %vm581, %v572, %v436
      %v591 = vsel %vm581, %v574, %v438
      %v593 = vsel %vm581, %v576, %v440
      %v595 = vsel %vm581, %v578, %v442
      %v597 = vsel %vm581, %v580, %v444
      %vm598 = vcmask 228352
      %v600 = vsel %vm598, %v583, %v456
      %v602 = vsel %vm598, %v585, %v458
      %v604 = vsel %vm598, %v587, %v460
      %v606 = vsel %vm598, %v589, %v462
      %v608 = vsel %vm598, %v591, %v464
      %v610 = vsel %vm598, %v593, %v466
      %v612 = vsel %vm598, %v595, %v468
      %v614 = vsel %vm598, %v597, %v470
      %vm615 = vcmask 261120
      %v617 = vsel %vm615, %v600, %v473
      %v619 = vsel %vm615, %v602, %v475
      %v621 = vsel %vm615, %v604, %v477
      %v623 = vsel %vm615, %v606, %v479
      %v625 = vsel %vm615, %v608, %v481
      %v627 = vsel %vm615, %v610, %v483
      %v629 = vsel %vm615, %v612, %v485
      %v631 = vsel %vm615, %v614, %v487
      %v632 = vld [vmem:[%s1] sm:$0xf]
      %v633 = vld [vmem:[%s1 + $0x4] sm:$0xf]
      %v634 = vld [vmem:[%s1 + $0x8] sm:$0xf]
      %v635 = vld [vmem:[%s1 + $0xc] sm:$0xf]
      %v636 = vld [vmem:[%s1 + $0x10] sm:$0x3]
      %v645 = vunpack.c.l.b16 %v617
      %v646 = vunpack.c.l.b16 %v619
      %v647 = vunpack.c.l.b16 %v621
      %v648 = vunpack.c.l.b16 %v623
      %v649 = vunpack.c.l.b16 %v625
      %v650 = vunpack.c.l.b16 %v627
      %v651 = vunpack.c.l.b16 %v629
      %v652 = vunpack.c.l.b16 %v631
      %v653 = vpack.c.b16 %v646, %v645
      %v654 = vpack.c.b16 %v648, %v647
      %v655 = vpack.c.b16 %v650, %v649
      %v656 = vpack.c.b16 %v652, %v651
      %v662 = vunpack.c.l.b16 %v632
      %v663 = vunpack.c.l.b16 %v633
      %v664 = vunpack.c.l.b16 %v634
      %v665 = vunpack.c.l.b16 %v635
      %v666 = vunpack.c.l.b16 %v636
      %v667 = vpack.c.b16 %v663, %v662
      %v668 = vpack.c.b16 %v665, %v664
      %v669 = vpack.c.b16 %v666, %v666
      %vm672 = vcmask 293888
      %v674 = vsel %vm672, %v653, 0
      %v677 = vsel %vm672, %v654, 0
      %v680 = vsel %vm672, %v655, 0
      %v683 = vsel %vm672, %v656, 0
      %vm685 = vcmask 1041408
      %v687 = vsel %vm685, %v669, 0
      %689 = vmatprep.subr.bf16.mxu0 0
      %690 = vmatpush1.bf16.msra.mxu0 0
      %691 = vmatprep.subr.bf16.mxu0 0
      %692 = vmatpush1.bf16.msra.mxu0 0
      %693 = vmatprep.subr.bf16.mxu0 0
      %694 = vmatpush1.bf16.msra.mxu0 0
      %695 = vmatprep.subr.bf16.mxu0 0
      %696 = vmatpush1.bf16.msra.mxu0 0
      %697 = vmatprep.subr.bf16.mxu0 0
      %698 = vmatpush1.bf16.msra.mxu0 0
      %699 = vmatprep.subr.bf16.mxu0 0
      %700 = vmatpush1.bf16.msra.mxu0 %v687
      %701 = vmatprep.subr.bf16.mxu0 0
      %702 = vmatpush1.bf16.msra.mxu0 %v668
      %703 = vmatprep.subr.bf16.mxu0 0
      %704 = vmatpush1.bf16.msra.mxu0 %v667
      %705 = vmatprep.subr.bf16.mxu0 0
      %706 = vmatpush2.bf16.msra.mxu0 0
      %707 = vmatprep.subr.bf16.mxu0 0
      %708 = vmatpush2.bf16.msra.mxu0 0
      %709 = vmatprep.subr.bf16.mxu0 0
      %710 = vmatpush2.bf16.msra.mxu0 0
      %711 = vmatprep.subr.bf16.mxu0 0
      %712 = vmatpush2.bf16.msra.mxu0 0
      %713 = vmatprep.subr.bf16.mxu0 0
      %714 = vmatpush2.bf16.msra.mxu0 0
      %715 = vmatprep.subr.bf16.mxu0 0
      %716 = vmatpush2.bf16.msra.mxu0 0
      %717 = vmatprep.subr.bf16.mxu0 0
      %718 = vmatpush2.bf16.msra.mxu0 0
      %719 = vmatprep.subr.bf16.mxu0 0
      %720 = vmatpush2.bf16.msra.mxu0 0
      %721 = vmatprep.mubr.bf16.mxu0 0
      %722 = vmatmul.mubr.bf16.gmra.mxu0 %v674
      %v723 = vpop.f32.mrf.mxu0
      %v724 = vadd.f32 0.0, %v723
      %v725 = vpop.f32.mrf.mxu0
      %v726 = vpop.f32.mrf.mxu0
      %v727 = vadd.f32 0.0, %v726
      %v728 = vpop.f32.mrf.mxu0
      %729 = vmatprep.mubr.bf16.mxu0 0
      %730 = vmatmul.mubr.bf16.gmra.mxu0 %v677
      %v731 = vpop.f32.mrf.mxu0
      %v732 = vadd.f32 0.0, %v731
      %v733 = vpop.f32.mrf.mxu0
      %v734 = vpop.f32.mrf.mxu0
      %v735 = vadd.f32 0.0, %v734
      %v736 = vpop.f32.mrf.mxu0
      %737 = vmatprep.mubr.bf16.mxu0 0
      %738 = vmatmul.mubr.bf16.gmra.mxu0 %v680
      %v739 = vpop.f32.mrf.mxu0
      %v740 = vadd.f32 0.0, %v739
      %v741 = vpop.f32.mrf.mxu0
      %v742 = vpop.f32.mrf.mxu0
      %v743 = vadd.f32 0.0, %v742
      %v744 = vpop.f32.mrf.mxu0
      %745 = vmatprep.mubr.bf16.mxu0 0
      %746 = vmatmul.mubr.bf16.gmra.mxu0 %v683
      %v747 = vpop.f32.mrf.mxu0
      %v748 = vadd.f32 0.0, %v747
      %v749 = vpop.f32.mrf.mxu0
      %v750 = vpop.f32.mrf.mxu0
      %v751 = vadd.f32 0.0, %v750
      %v752 = vpop.f32.mrf.mxu0
      %753 = vdwg.mxu0
      %v754 = vpack.c.bf16 %v724, %v724
      %v755 = vpack.c.bf16 %v727, %v727
      %v756 = vpack.c.bf16 %v732, %v732
      %v757 = vpack.c.bf16 %v735, %v735
      %v758 = vpack.c.bf16 %v740, %v740
      %v759 = vpack.c.bf16 %v743, %v743
      %v760 = vpack.c.bf16 %v748, %v748
      %v761 = vpack.c.bf16 %v751, %v751
      %vm762 = vcmask 60416
      %763 = vst.msk [vmem:[%s192] sm:$0xf] %vm762, %v754
      %764 = vst.msk [vmem:[%s192 + $0x4] sm:$0xf] %vm762, %v755
      %765 = vst.msk [vmem:[%s192 + $0x8] sm:$0xf] %vm762, %v756
      %766 = vst.msk [vmem:[%s192 + $0xc] sm:$0xf] %vm762, %v757
      %767 = vst.msk [vmem:[%s192 + $0x10] sm:$0xf] %vm762, %v758
      %768 = vst.msk [vmem:[%s192 + $0x14] sm:$0xf] %vm762, %v759
      %769 = vst.msk [vmem:[%s192 + $0x18] sm:$0xf] %vm762, %v760
      %770 = vst.msk [vmem:[%s192 + $0x1c] sm:$0xf] %vm762, %v761
      %v771 = vld [vmem:[%s3] sm:$0x1]
      %v772 = vsel %vm513, %v724, 0.0
      %v773 = vsel %vm513, %v727, 0.0
      %v774 = vadd.f32 %v772, %v773
      %v775 = vsel %vm513, %v732, 0.0
      %v776 = vadd.f32 %v774, %v775
      %v777 = vsel %vm513, %v735, 0.0
      %v778 = vadd.f32 %v776, %v777
      %v779 = vsel %vm513, %v740, 0.0
      %v780 = vadd.f32 %v778, %v779
      %v781 = vsel %vm513, %v743, 0.0
      %v782 = vadd.f32 %v780, %v781
      %v783 = vsel %vm513, %v748, 0.0
      %v784 = vadd.f32 %v782, %v783
      %v785 = vsel %vm513, %v751, 0.0
      %v786 = vadd.f32 %v784, %v785
      %v787 = vrot.slane %v786, 4
      %v788 = vadd.f32 %v786, %v787
      %v789 = vrot.slane %v788, 2
      %v790 = vadd.f32 %v788, %v789
      %v791 = vrot.slane %v790, 1
      %v792 = vadd.f32 %v790, %v791
      %v793 = vadd.f32 %v771, %v792
      %vm794 = vcmask 57344
      %795 = vst.msk [vmem:[%s3] sm:$0x1] %vm794, %v793
      %v796 = vld [vmem:[%s4] sm:$0x1]
      %v797 = vmul.f32 %v724, %v724
      %v798 = vmul.f32 %v727, %v727
      %v799 = vmul.f32 %v732, %v732
      %v800 = vmul.f32 %v735, %v735
      %v801 = vmul.f32 %v740, %v740
      %v802 = vmul.f32 %v743, %v743
      %v803 = vmul.f32 %v748, %v748
      %v804 = vmul.f32 %v751, %v751
      %v805 = vsel %vm513, %v797, 0.0
      %v806 = vsel %vm513, %v798, 0.0
      %v807 = vadd.f32 %v805, %v806
      %v808 = vsel %vm513, %v799, 0.0
      %v809 = vadd.f32 %v807, %v808
      %v810 = vsel %vm513, %v800, 0.0
      %v811 = vadd.f32 %v809, %v810
      %v812 = vsel %vm513, %v801, 0.0
      %v813 = vadd.f32 %v811, %v812
      %v814 = vsel %vm513, %v802, 0.0
      %v815 = vadd.f32 %v813, %v814
      %v816 = vsel %vm513, %v803, 0.0
      %v817 = vadd.f32 %v815, %v816
      %v818 = vsel %vm513, %v804, 0.0
      %v819 = vadd.f32 %v817, %v818
      %v820 = vrot.slane %v819, 4
      %v821 = vadd.f32 %v819, %v820
      %v822 = vrot.slane %v821, 2
      %v823 = vadd.f32 %v821, %v822
      %v824 = vrot.slane %v823, 1
      %v825 = vadd.f32 %v823, %v824
      %v826 = vadd.f32 %v796, %v825
      %827 = vst.msk [vmem:[%s4] sm:$0x1] %vm794, %v826
      %p828 = scmp.lt.s32.totalorder %s16, 1
      %s829 = scalar_select %p828, %s16, 1
      %s830 = smul.addr %s829, 8
      %s831 = smul.addr %s830, 4
      %s832 = scalar_lea.vmem %s2, %s831
      // Predicated region
      $region33: #{down_forward.3} parent=27 // pred_check
        %p833 = pneg %p81
      $region34: #{down_forward.3} parent=27 // pred_check_branch
        %835 = sbr.rel (%p833) target = $region36
      $region35: #{down_forward.3} parent=27 // pred_region
        _
      $region36: #{down_forward.3} parent=27 // pred_fallthru
        _
      // Predicated region
      $region37: #{down_forward.3} parent=27 // pred_check
        %p836 = pneg %p102
      $region38: #{down_forward.3} parent=27 // pred_check_branch
        %838 = sbr.rel (%p836) target = $region40
      $region39: #{down_forward.3} parent=27 // pred_region
        _
      $region40: #{down_forward.3} parent=27 // pred_fallthru
        _
      // Predicated region
      $region41: #{down_forward.3} parent=27 // pred_check
        %p839 = pneg %p123
      $region42: #{down_forward.3} parent=27 // pred_check_branch
        %841 = sbr.rel (%p839) target = $region44
      $region43: #{down_forward.3} parent=27 // pred_region
        _
      $region44: #{down_forward.3} parent=27 // pred_fallthru
        _
      // Predicated region
      $region45: #{down_forward.3} parent=27 // pred_check
        %p842 = pneg %p102
      $region46: #{down_forward.3} parent=27 // pred_check_branch
        %844 = sbr.rel (%p842) target = $region48
      $region47: #{down_forward.3} parent=27 // pred_region
        _
      $region48: #{down_forward.3} parent=27 // pred_fallthru
        _
      // Predicated region
      $region49: #{down_forward.3} parent=27 // pred_check
        %p845 = pneg %p123
      $region50: #{down_forward.3} parent=27 // pred_check_branch
        %847 = sbr.rel (%p845) target = $region52
      $region51: #{down_forward.3} parent=27 // pred_region
        _
      $region52: #{down_forward.3} parent=27 // pred_fallthru
        _
    $region28: #{down_forward.3} parent=5 // pred_fallthru
      _
    %p848 = scmp.le.s32.totalorder 2, %s11
    // Predicated region
    $region53: #{down_forward.3} parent=5 // pred_check
      %p849 = pneg %p848
    $region54: #{down_forward.3} parent=5 // pred_check_branch
      %851 = sbr.rel (%p849) target = $region56
    $region55: #{down_forward.3} parent=5 // pred_region
      %s852 = ssub.s32 %s11, 2
      // Predicated region
      $region57: #{down_forward.3} parent=55 // pred_check
        %p853 = pneg %p87
      $region58: #{down_forward.3} parent=55 // pred_check_branch
        %855 = sbr.rel (%p853) target = $region60
      $region59: #{down_forward.3} parent=55 // pred_region
        %p856 = scmp.lt.s32.totalorder %s17, 1
        %s857 = scalar_select %p856, %s17, 1
        %s858 = smul.addr %s857, 8
        %s859 = smul.addr %s858, 4
        %s860 = scalar_lea.vmem %s2, %s859
      $region60: #{down_forward.3} parent=55 // pred_fallthru
        _
    $region56: #{down_forward.3} parent=5 // pred_fallthru
      _
  $region6: #{down_forward.3} parent=0 // loop_footer
    %s15 = sadd.s32 1, %s11
  $region7: #{down_forward.3} parent=0 // loop_footer_branch
    %10 = sbr.rel target = $region3
  $region8: #{down_forward.3} parent=0 // loop_exit
    _

// kernel: down_forward.4
$region0: #{down_forward.4}
  #allocation0 [shape = 'u32[]', space=smem, size = 0x4, offset = 0x4, fixed_abs, tag = 'smem constant byte address 0x4 - core index']
  #allocation1 [shape = 'u32[144,128]{1,0:T(1,128)}', space=vmem, size = 0x12000, scoped, tag = 'internal scratch']
  #allocation2 [shape = 'bf16[10,10,8]{2,1,0:T(8,128)(2,1)}', space=vmem, size = 0xa000, scoped, tag = 'scratch operand']
  %s0 = inlined_call_operand.vmem [shape: bf16[2,8,8,8], index: 0, kind: input, shape index: {}]
  %s1 = inlined_call_operand.vmem [shape: bf16[72,8], index: 1, kind: input, shape index: {}]
  %s2 = inlined_call_operand.vmem [shape: f32[1,8], index: 2, kind: input, shape index: {}]
  %s3 = inlined_call_operand.vmem [shape: f32[1,8], index: 3, kind: input, shape index: {}]
  %s4 = inlined_call_operand.vmem [shape: bf16[2,8,8,8], index: 4, kind: output, shape index: {0}]
  %s5 = inlined_call_operand.vmem [shape: f32[1,8], index: 5, kind: output, shape index: {1}]
  %s6 = inlined_call_operand.vmem [shape: f32[1,8], index: 6, kind: output, shape index: {2}]
  %7 = xla_tuple %s4, %s5, %s6
  %s8 = sld [smem:[#allocation0]]
  $region69: #{down_forward.4} parent=0
    _
  %s10 = ssub.s32 1, %s8
  %s11 = scalar_select 0, %s10, %s8
  loop: start=0, step=1, limit=4
  $region2: #{down_forward.4} parent=0 // loop_pre_header
    _
  $region3: #{down_forward.4} parent=0 // loop_header
    %s13 = sphi 0, %s17
    %p14 = scmp.ge.s32.totalorder %s13, 4
    %s23 = sphi 0, %s25
    %s26 = sphi 0, %s23
    %s27 = sphi 0, %s26
    %s43 = sphi 0, %s27
    %s47 = sphi 0, %s47
    %s49 = sphi 0, %s47
    %s50 = sphi 0, %s49
    %s64 = sphi 0, %s50
    %s68 = sphi 0, %s68
    %s70 = sphi 0, %s68
    %s71 = sphi 0, %s70
    %s85 = sphi 0, %s71
    %s89 = sphi 0, %s89
    %s91 = sphi 0, %s89
    %s92 = sphi 0, %s91
    %s106 = sphi 0, %s92
    %s112 = sphi 0, %s114
    %s115 = sphi 0, %s112
    %s116 = sphi 0, %s115
    %s132 = sphi 0, %s116
    %s136 = sphi 0, %s136
    %s138 = sphi 0, %s136
    %s139 = sphi 0, %s138
    %s153 = sphi 0, %s139
    %s157 = sphi 0, %s157
    %s159 = sphi 0, %s157
    %s160 = sphi 0, %s159
    %s174 = sphi 0, %s160
  $region4: #{down_forward.4} parent=0 // loop_header_branch
    %16 = sbr.rel (%p14) target = $region8
  $region5: #{down_forward.4} parent=0 // loop_body
    %s18 = ssub.s32 %s13, 1
    %s19 = ssub.s32 %s13, 2
    %s20 = sadd.s32 %s13, 1
    %s21 = ssub.s32 %s13, %s20
    %p22 = scmp.eq.s32.totalorder %s21, 0
    %s24 = sadd.s32 %s23, 1
    %s25 = scalar_select %p22, %s23, %s24
    %p28 = pneg %p22
    %p29 = scmp.eq.s32.totalorder %s13, 1
    %p30 = por %p28, %p29
    %p31 = scmp.ne.s32.totalorder %s23, %s26
    %p32 = scmp.eq.s32.totalorder %s13, 0
    %p33 = por %p31, %p32
    %p34 = scmp.ne.s32.totalorder %s23, %s26
    %p35 = scmp.eq.s32.totalorder %s18, 1
    %p36 = por %p34, %p35
    %p37 = scmp.ne.s32.totalorder %s26, %s27
    %p38 = scmp.eq.s32.totalorder %s18, 0
    %p39 = por %p37, %p38
    %p40 = scmp.ne.s32.totalorder %s26, %s27
    %p41 = scmp.eq.s32.totalorder %s19, 1
    %p42 = por %p40, %p41
    %p44 = scmp.ne.s32.totalorder %s27, %s43
    %p45 = scmp.eq.s32.totalorder %s19, 0
    %p46 = por %p44, %p45
    %s48 = sadd.s32 %s47, 1
    %p51 = scmp.eq.s32.totalorder %s13, 1
    %p52 = scmp.ne.s32.totalorder %s47, %s49
    %p53 = scmp.eq.s32.totalorder %s13, 0
    %p54 = por %p52, %p53
    %p55 = scmp.ne.s32.totalorder %s47, %s49
    %p56 = scmp.eq.s32.totalorder %s18, 1
    %p57 = por %p55, %p56
    %p58 = scmp.ne.s32.totalorder %s49, %s50
    %p59 = scmp.eq.s32.totalorder %s18, 0
    %p60 = por %p58, %p59
    %p61 = scmp.ne.s32.totalorder %s49, %s50
    %p62 = scmp.eq.s32.totalorder %s19, 1
    %p63 = por %p61, %p62
    %p65 = scmp.ne.s32.totalorder %s50, %s64
    %p66 = scmp.eq.s32.totalorder %s19, 0
    %p67 = por %p65, %p66
    %s69 = sadd.s32 %s68, 1
    %p72 = scmp.eq.s32.totalorder %s13, 1
    %p73 = scmp.ne.s32.totalorder %s68, %s70
    %p74 = scmp.eq.s32.totalorder %s13, 0
    %p75 = por %p73, %p74
    %p76 = scmp.ne.s32.totalorder %s68, %s70
    %p77 = scmp.eq.s32.totalorder %s18, 1
    %p78 = por %p76, %p77
    %p79 = scmp.ne.s32.totalorder %s70, %s71
    %p80 = scmp.eq.s32.totalorder %s18, 0
    %p81 = por %p79, %p80
    %p82 = scmp.ne.s32.totalorder %s70, %s71
    %p83 = scmp.eq.s32.totalorder %s19, 1
    %p84 = por %p82, %p83
    %p86 = scmp.ne.s32.totalorder %s71, %s85
    %p87 = scmp.eq.s32.totalorder %s19, 0
    %p88 = por %p86, %p87
    %s90 = sadd.s32 %s89, 1
    %p93 = scmp.eq.s32.totalorder %s13, 1
    %p94 = scmp.ne.s32.totalorder %s89, %s91
    %p95 = scmp.eq.s32.totalorder %s13, 0
    %p96 = por %p94, %p95
    %p97 = scmp.ne.s32.totalorder %s89, %s91
    %p98 = scmp.eq.s32.totalorder %s18, 1
    %p99 = por %p97, %p98
    %p100 = scmp.ne.s32.totalorder %s91, %s92
    %p101 = scmp.eq.s32.totalorder %s18, 0
    %p102 = por %p100, %p101
    %p103 = scmp.ne.s32.totalorder %s91, %s92
    %p104 = scmp.eq.s32.totalorder %s19, 1
    %p105 = por %p103, %p104
    %p107 = scmp.ne.s32.totalorder %s92, %s106
    %p108 = scmp.eq.s32.totalorder %s19, 0
    %p109 = por %p107, %p108
    %s110 = ssub.s32 %s13, %s20
    %p111 = scmp.eq.s32.totalorder %s110, 0
    %s113 = sadd.s32 %s112, 1
    %s114 = scalar_select %p111, %s112, %s113
    %p117 = pneg %p111
    %p118 = scmp.eq.s32.totalorder %s13, 1
    %p119 = por %p117, %p118
    %p120 = scmp.ne.s32.totalorder %s112, %s115
    %p121 = scmp.eq.s32.totalorder %s13, 0
    %p122 = por %p120, %p121
    %p123 = scmp.ne.s32.totalorder %s112, %s115
    %p124 = scmp.eq.s32.totalorder %s18, 1
    %p125 = por %p123, %p124
    %p126 = scmp.ne.s32.totalorder %s115, %s116
    %p127 = scmp.eq.s32.totalorder %s18, 0
    %p128 = por %p126, %p127
    %p129 = scmp.ne.s32.totalorder %s115, %s116
    %p130 = scmp.eq.s32.totalorder %s19, 1
    %p131 = por %p129, %p130
    %p133 = scmp.ne.s32.totalorder %s116, %s132
    %p134 = scmp.eq.s32.totalorder %s19, 0
    %p135 = por %p133, %p134
    %s137 = sadd.s32 %s136, 1
    %p140 = scmp.eq.s32.totalorder %s13, 1
    %p141 = scmp.ne.s32.totalorder %s136, %s138
    %p142 = scmp.eq.s32.totalorder %s13, 0
    %p143 = por %p141, %p142
    %p144 = scmp.ne.s32.totalorder %s136, %s138
    %p145 = scmp.eq.s32.totalorder %s18, 1
    %p146 = por %p144, %p145
    %p147 = scmp.ne.s32.totalorder %s138, %s139
    %p148 = scmp.eq.s32.totalorder %s18, 0
    %p149 = por %p147, %p148
    %p150 = scmp.ne.s32.totalorder %s138, %s139
    %p151 = scmp.eq.s32.totalorder %s19, 1
    %p152 = por %p150, %p151
    %p154 = scmp.ne.s32.totalorder %s139, %s153
    %p155 = scmp.eq.s32.totalorder %s19, 0
    %p156 = por %p154, %p155
    %s158 = sadd.s32 %s157, 1
    %p161 = scmp.eq.s32.totalorder %s13, 1
    %p162 = scmp.ne.s32.totalorder %s157, %s159
    %p163 = scmp.eq.s32.totalorder %s13, 0
    %p164 = por %p162, %p163
    %p165 = scmp.ne.s32.totalorder %s157, %s159
    %p166 = scmp.eq.s32.totalorder %s18, 1
    %p167 = por %p165, %p166
    %p168 = scmp.ne.s32.totalorder %s159, %s160
    %p169 = scmp.eq.s32.totalorder %s18, 0
    %p170 = por %p168, %p169
    %p171 = scmp.ne.s32.totalorder %s159, %s160
    %p172 = scmp.eq.s32.totalorder %s19, 1
    %p173 = por %p171, %p172
    %p175 = scmp.ne.s32.totalorder %s160, %s174
    %p176 = scmp.eq.s32.totalorder %s19, 0
    %p177 = por %p175, %p176
    %p178 = scmp.le.s32.totalorder 1, %s13
    %p179 = scmp.lt.s32.totalorder %s13, 3
    %p180 = pnand %p178, %p179
    %p181 = pneg %p180
    // Predicated region
    $region9: #{down_forward.4} parent=5 // pred_check
      _
    $region10: #{down_forward.4} parent=5 // pred_check_branch
      %183 = sbr.rel (%p180) target = $region12
    $region11: #{down_forward.4} parent=5 // pred_region
      %s184 = ssub.s32 %s13, 1
      // Predicated region
      $region13: #{down_forward.4} parent=11 // pred_check
        %p185 = pneg %p60
      $region14: #{down_forward.4} parent=11 // pred_check_branch
        %187 = sbr.rel (%p185) target = $region16
      $region15: #{down_forward.4} parent=11 // pred_region
        _
      $region16: #{down_forward.4} parent=11 // pred_fallthru
        _
      // Predicated region
      $region17: #{down_forward.4} parent=11 // pred_check
        %p188 = pneg %p81
      $region18: #{down_forward.4} parent=11 // pred_check_branch
        %190 = sbr.rel (%p188) target = $region20
      $region19: #{down_forward.4} parent=11 // pred_region
        _
      $region20: #{down_forward.4} parent=11 // pred_fallthru
        _
      // Predicated region
      $region21: #{down_forward.4} parent=11 // pred_check
        %p191 = pneg %p102
      $region22: #{down_forward.4} parent=11 // pred_check_branch
        %193 = sbr.rel (%p191) target = $region24
      $region23: #{down_forward.4} parent=11 // pred_region
        _
      $region24: #{down_forward.4} parent=11 // pred_fallthru
        _
    $region12: #{down_forward.4} parent=5 // pred_fallthru
      _
    %p194 = scmp.lt.s32.totalorder %s13, 2
    // Predicated region
    $region25: #{down_forward.4} parent=5 // pred_check
      %p195 = pneg %p194
    $region26: #{down_forward.4} parent=5 // pred_check_branch
      %197 = sbr.rel (%p195) target = $region28
    $region27: #{down_forward.4} parent=5 // pred_region
      // Predicated region
      $region29: #{down_forward.4} parent=27 // pred_check
        %p198 = pneg %p33
      $region30: #{down_forward.4} parent=27 // pred_check_branch
        %200 = sbr.rel (%p198) target = $region32
      $region31: #{down_forward.4} parent=27 // pred_region
        %p201 = scmp.lt.s32.totalorder %s13, 1
        %s202 = scalar_select %p201, %s13, 1
        %s203 = smul.addr %s202, 8
        %s204 = smul.addr %s203, 4
        %s205 = scalar_lea.vmem %s0, %s204
      $region32: #{down_forward.4} parent=27 // pred_fallthru
        _
    $region28: #{down_forward.4} parent=5 // pred_fallthru
      _
    %p206 = scmp.le.s32.totalorder 1, %s13
    %p207 = scmp.lt.s32.totalorder %s13, 3
    %p208 = pnand %p206, %p207
    %p209 = pneg %p208
    // Predicated region
    $region33: #{down_forward.4} parent=5 // pred_check
      _
    $region34: #{down_forward.4} parent=5 // pred_check_branch
      %211 = sbr.rel (%p208) target = $region36
    $region35: #{down_forward.4} parent=5 // pred_region
      %s212 = ssub.s32 %s13, 1
      %p213 = scmp.lt.s32.totalorder %s18, 1
      %s214 = scalar_select %p213, %s18, 1
      %s215 = smul.addr %s214, 8
      %s216 = smul.addr %s215, 4
      %s217 = scalar_lea.vmem %s0, %s216
      %p218 = pneg %p39
      %p219 = pneg %p36
      %p220 = pneg %p60
      %p221 = pneg %p57
      %p222 = pneg %p81
      %p223 = pneg %p78
      %p224 = pneg %p102
      %p225 = pneg %p99
      %p226 = pneg %p128
      %p227 = pneg %p125
      %p228 = scmp.lt.s32.totalorder %s18, 1
      %s229 = scalar_select %p228, %s18, 1
      %s230 = smul.addr %s229, 8
      %s231 = smul.addr %s230, 4
      %s232 = scalar_lea.vmem %s4, %s231
      %p233 = pneg %p149
      %p234 = pneg %p146
      %p235 = pneg %p170
      %p236 = pneg %p167
      %p237 = scmp.lt.s32.totalorder %s18, 1
      %s238 = scalar_select %p237, %s18, 1
      %s239 = smul.addr %s238, 8
      %s240 = smul.addr %s239, 4
      %s241 = scalar_lea.vmem %s0, %s240
      %p242 = scmp.lt.s32.totalorder %s18, 1
      %s243 = scalar_select %p242, %s18, 1
      %s244 = smul.addr %s243, 8
      %s245 = smul.addr %s244, 4
      %s246 = scalar_lea.vmem %s4, %s245
      %p248 = scmp.eq.s32.totalorder %s18, 0
      // Predicated region
      $region37: #{down_forward.4} parent=35 // pred_check
        %p249 = pneg %p248
      $region38: #{down_forward.4} parent=35 // pred_check_branch
        %251 = sbr.rel (%p249) target = $region40
      $region39: #{down_forward.4} parent=35 // pred_region
        %vm252 = vcmask 60416
        %253 = vst.msk [vmem:[#allocation2] sm:$0xf] %vm252, 0
        %vm254 = vcmask 57344
        %255 = vst.msk [vmem:[#allocation2 + $0x4] sm:$0x1] %vm254, 0
        %256 = vst.msk [vmem:[#allocation2 + $0x8] sm:$0xf] %vm252, 0
        %257 = vst.msk [vmem:[#allocation2 + $0xc] sm:$0x1] %vm254, 0
        %258 = vst.msk [vmem:[#allocation2 + $0x10] sm:$0xf] %vm252, 0
        %259 = vst.msk [vmem:[#allocation2 + $0x14] sm:$0x1] %vm254, 0
        %260 = vst.msk [vmem:[#allocation2 + $0x18] sm:$0xf] %vm252, 0
        %261 = vst.msk [vmem:[#allocation2 + $0x1c] sm:$0x1] %vm254, 0
        %262 = vst.msk [vmem:[#allocation2 + $0x20] sm:$0xf] %vm252, 0
        %263 = vst.msk [vmem:[#allocation2 + $0x24] sm:$0x1] %vm254, 0
        %264 = vst.msk [vmem:[#allocation2 + $0x28] sm:$0xf] %vm252, 0
        %265 = vst.msk [vmem:[#allocation2 + $0x2c] sm:$0x1] %vm254, 0
        %266 = vst.msk [vmem:[#allocation2 + $0x30] sm:$0xf] %vm252, 0
        %267 = vst.msk [vmem:[#allocation2 + $0x34] sm:$0x1] %vm254, 0
        %268 = vst.msk [vmem:[#allocation2 + $0x38] sm:$0xf] %vm252, 0
        %269 = vst.msk [vmem:[#allocation2 + $0x3c] sm:$0x1] %vm254, 0
        %270 = vst.msk [vmem:[#allocation2 + $0x40] sm:$0xf] %vm252, 0
        %271 = vst.msk [vmem:[#allocation2 + $0x44] sm:$0x1] %vm254, 0
        %272 = vst.msk [vmem:[#allocation2 + $0x48] sm:$0xf] %vm252, 0
        %273 = vst.msk [vmem:[#allocation2 + $0x4c] sm:$0x1] %vm254, 0
        %274 = vst.msk [vmem:[%s5] sm:$0x1] %vm254, 0.0
        %275 = vst.msk [vmem:[%s6] sm:$0x1] %vm254, 0.0
      $region40: #{down_forward.4} parent=35 // pred_fallthru
        _
      %v276 = vld [vmem:[%s241] sm:$0xf]
      %v277 = vld [vmem:[%s241 + $0x4] sm:$0xf]
      %v278 = vld [vmem:[%s241 + $0x8] sm:$0xf]
      %v279 = vld [vmem:[%s241 + $0xc] sm:$0xf]
      %v280 = vld [vmem:[%s241 + $0x10] sm:$0xf]
      %v281 = vld [vmem:[%s241 + $0x14] sm:$0xf]
      %v282 = vld [vmem:[%s241 + $0x18] sm:$0xf]
      %v283 = vld [vmem:[%s241 + $0x1c] sm:$0xf]
      %v284 = vunpack.c.l.bf16 %v276
      %v285 = vunpack.c.l.bf16 %v277
      %v286 = vunpack.c.l.bf16 %v278
      %v287 = vunpack.c.l.bf16 %v279
      %v288 = vunpack.c.l.bf16 %v280
      %v289 = vunpack.c.l.bf16 %v281
      %v290 = vunpack.c.l.bf16 %v282
      %v291 = vunpack.c.l.bf16 %v283
      %v292 = vld [vmem:[%s2] sm:$0x1]
      %v294 = vlaneseq
      %v295 = vshrl.u32 %v294, 7
      %v296 = vsub.s32 0, %v295
      %v297 = vrot.slane %v292, %v296
      %v299 = vmul.f32 %v284, %v297
      %v300 = vmul.f32 %v285, %v297
      %v301 = vmul.f32 %v286, %v297
      %v302 = vmul.f32 %v287, %v297
      %v303 = vmul.f32 %v288, %v297
      %v304 = vmul.f32 %v289, %v297
      %v305 = vmul.f32 %v290, %v297
      %v306 = vmul.f32 %v291, %v297
      %v307 = vld [vmem:[%s3] sm:$0x1]
      %v309 = vlaneseq
      %v310 = vshrl.u32 %v309, 7
      %v311 = vsub.s32 0, %v310
      %v312 = vrot.slane %v307, %v311
      %v314 = vadd.f32 %v299, %v312
      %v315 = vadd.f32 %v300, %v312
      %v316 = vadd.f32 %v301, %v312
      %v317 = vadd.f32 %v302, %v312
      %v318 = vadd.f32 %v303, %v312
      %v319 = vadd.f32 %v304, %v312
      %v320 = vadd.f32 %v305, %v312
      %v321 = vadd.f32 %v306, %v312
      %v322 = vmax.f32 %v314, 0.0
      %v323 = vmax.f32 %v315, 0.0
      %v324 = vmax.f32 %v316, 0.0
      %v325 = vmax.f32 %v317, 0.0
      %v326 = vmax.f32 %v318, 0.0
      %v327 = vmax.f32 %v319, 0.0
      %v328 = vmax.f32 %v320, 0.0
      %v329 = vmax.f32 %v321, 0.0
      %v330 = vpack.c.bf16 %v322, %v322
      %v331 = vpack.c.bf16 %v323, %v323
      %v332 = vpack.c.bf16 %v324, %v324
      %v333 = vpack.c.bf16 %v325, %v325
      %v334 = vpack.c.bf16 %v326, %v326
      %v335 = vpack.c.bf16 %v327, %v327
      %v336 = vpack.c.bf16 %v328, %v328
      %v337 = vpack.c.bf16 %v329, %v329
      %v346 = vunpack.c.l.b16 %v330
      %v347 = vunpack.c.l.b16 %v331
      %v348 = vunpack.c.l.b16 %v332
      %v349 = vunpack.c.l.b16 %v333
      %v350 = vunpack.c.l.b16 %v334
      %v351 = vunpack.c.l.b16 %v335
      %v352 = vunpack.c.l.b16 %v336
      %v353 = vunpack.c.l.b16 %v337
      %v354 = vpack.c.b16 %v346, %v346
      %v355 = vpack.c.b16 %v347, %v347
      %v356 = vpack.c.b16 %v348, %v348
      %v357 = vpack.c.b16 %v349, %v349
      %v358 = vpack.c.b16 %v350, %v350
      %v359 = vpack.c.b16 %v351, %v351
      %v360 = vpack.c.b16 %v352, %v352
      %v361 = vpack.c.b16 %v353, %v353
      %v363 = vshrl.u32 %v354, 16
      %v365 = vrot.slane %v363, 7
      %v366 = vshll.u32 %v354, 16
      %v368 = vor.u32 %v365, %v366
      %v369 = vrot.slane %v365, 4
      %v371 = vshrl.u32 %v355, 16
      %v373 = vrot.slane %v371, 7
      %v374 = vshll.u32 %v355, 16
      %v376 = vor.u32 %v373, %v374
      %v377 = vrot.slane %v373, 4
      %v379 = vshrl.u32 %v356, 16
      %v381 = vrot.slane %v379, 7
      %v382 = vshll.u32 %v356, 16
      %v384 = vor.u32 %v381, %v382
      %v385 = vrot.slane %v381, 4
      %v387 = vshrl.u32 %v357, 16
      %v389 = vrot.slane %v387, 7
      %v390 = vshll.u32 %v357, 16
      %v392 = vor.u32 %v389, %v390
      %v393 = vrot.slane %v389, 4
      %v395 = vshrl.u32 %v358, 16
      %v397 = vrot.slane %v395, 7
      %v398 = vshll.u32 %v358, 16
      %v400 = vor.u32 %v397, %v398
      %v401 = vrot.slane %v397, 4
      %v403 = vshrl.u32 %v359, 16
      %v405 = vrot.slane %v403, 7
      %v406 = vshll.u32 %v359, 16
      %v408 = vor.u32 %v405, %v406
      %v409 = vrot.slane %v405, 4
      %v411 = vshrl.u32 %v360, 16
      %v413 = vrot.slane %v411, 7
      %v414 = vshll.u32 %v360, 16
      %v416 = vor.u32 %v413, %v414
      %v417 = vrot.slane %v413, 4
      %v419 = vshrl.u32 %v361, 16
      %v421 = vrot.slane %v419, 7
      %v422 = vshll.u32 %v361, 16
      %v424 = vor.u32 %v421, %v422
      %v425 = vrot.slane %v421, 4
      %s442 = scalar_lea.vmem [#allocation2], 8
      %vm443 = vcmask 60416
      %vm444 = vsmask.f32 7938
      %vm445 = vmand %vm443, %vm444
      %v446 = vld [vmem:[%s442] sm:$0xf]
      %v447 = vsel %vm445, %v368, %v446
      %448 = vst [vmem:[%s442] sm:$0xf] %v447
      %vm449 = vcmask 57344
      %vm450 = vsmask.f32 256
      %vm451 = vmand %vm449, %vm450
      %v452 = vld [vmem:[%s442 + $0x4] sm:$0x1]
      %v453 = vsel %vm451, %v369, %v452
      %454 = vst [vmem:[%s442 + $0x4] sm:$0x1] %v453
      %v455 = vld [vmem:[%s442 + $0x8] sm:$0xf]
      %v456 = vsel %vm445, %v376, %v455
      %457 = vst [vmem:[%s442 + $0x8] sm:$0xf] %v456
      %v458 = vld [vmem:[%s442 + $0xc] sm:$0x1]
      %v459 = vsel %vm451, %v377, %v458
      %460 = vst [vmem:[%s442 + $0xc] sm:$0x1] %v459
      %v461 = vld [vmem:[%s442 + $0x10] sm:$0xf]
      %v462 = vsel %vm445, %v384, %v461
      %463 = vst [vmem:[%s442 + $0x10] sm:$0xf] %v462
      %v464 = vld [vmem:[%s442 + $0x14] sm:$0x1]
      %v465 = vsel %vm451, %v385, %v464
      %466 = vst [vmem:[%s442 + $0x14] sm:$0x1] %v465
      %v467 = vld [vmem:[%s442 + $0x18] sm:$0xf]
      %v468 = vsel %vm445, %v392, %v467
      %469 = vst [vmem:[%s442 + $0x18] sm:$0xf] %v468
      %v470 = vld [vmem:[%s442 + $0x1c] sm:$0x1]
      %v471 = vsel %vm451, %v393, %v470
      %472 = vst [vmem:[%s442 + $0x1c] sm:$0x1] %v471
      %v473 = vld [vmem:[%s442 + $0x20] sm:$0xf]
      %v474 = vsel %vm445, %v400, %v473
      %475 = vst [vmem:[%s442 + $0x20] sm:$0xf] %v474
      %v476 = vld [vmem:[%s442 + $0x24] sm:$0x1]
      %v477 = vsel %vm451, %v401, %v476
      %478 = vst [vmem:[%s442 + $0x24] sm:$0x1] %v477
      %v479 = vld [vmem:[%s442 + $0x28] sm:$0xf]
      %v480 = vsel %vm445, %v408, %v479
      %481 = vst [vmem:[%s442 + $0x28] sm:$0xf] %v480
      %v482 = vld [vmem:[%s442 + $0x2c] sm:$0x1]
      %v483 = vsel %vm451, %v409, %v482
      %484 = vst [vmem:[%s442 + $0x2c] sm:$0x1] %v483
      %v485 = vld [vmem:[%s442 + $0x30] sm:$0xf]
      %v486 = vsel %vm445, %v416, %v485
      %487 = vst [vmem:[%s442 + $0x30] sm:$0xf] %v486
      %v488 = vld [vmem:[%s442 + $0x34] sm:$0x1]
      %v489 = vsel %vm451, %v417, %v488
      %490 = vst [vmem:[%s442 + $0x34] sm:$0x1] %v489
      %v491 = vld [vmem:[%s442 + $0x38] sm:$0xf]
      %v492 = vsel %vm445, %v424, %v491
      %493 = vst [vmem:[%s442 + $0x38] sm:$0xf] %v492
      %v494 = vld [vmem:[%s442 + $0x3c] sm:$0x1]
      %v495 = vsel %vm451, %v425, %v494
      %496 = vst [vmem:[%s442 + $0x3c] sm:$0x1] %v495
      %v497 = vld [vmem:[#allocation2] sm:$0xf]
      %v498 = vld [vmem:[#allocation2 + $0x4] sm:$0x1]
      %v499 = vld [vmem:[#allocation2 + $0x8] sm:$0xf]
      %v500 = vld [vmem:[#allocation2 + $0xc] sm:$0x1]
      %v501 = vld [vmem:[#allocation2 + $0x10] sm:$0xf]
      %v502 = vld [vmem:[#allocation2 + $0x14] sm:$0x1]
      %v503 = vld [vmem:[#allocation2 + $0x18] sm:$0xf]
      %v504 = vld [vmem:[#allocation2 + $0x1c] sm:$0x1]
      %v505 = vld [vmem:[#allocation2 + $0x20] sm:$0xf]
      %v506 = vld [vmem:[#allocation2 + $0x24] sm:$0x1]
      %v507 = vld [vmem:[#allocation2 + $0x28] sm:$0xf]
      %v508 = vld [vmem:[#allocation2 + $0x2c] sm:$0x1]
      %v509 = vld [vmem:[#allocation2 + $0x30] sm:$0xf]
      %v510 = vld [vmem:[#allocation2 + $0x34] sm:$0x1]
      %v511 = vld [vmem:[#allocation2 + $0x38] sm:$0xf]
      %v512 = vld [vmem:[#allocation2 + $0x3c] sm:$0x1]
      %v513 = vld [vmem:[#allocation2 + $0x40] sm:$0xf]
      %v514 = vld [vmem:[#allocation2 + $0x44] sm:$0x1]
      %v515 = vld [vmem:[#allocation2 + $0x48] sm:$0xf]
      %v516 = vld [vmem:[#allocation2 + $0x4c] sm:$0x1]
      %v533 = vunpack.c.l.b16 %v497
      %v534 = vunpack.c.l.b16 %v498
      %v535 = vunpack.c.l.b16 %v499
      %v536 = vunpack.c.l.b16 %v500
      %v537 = vunpack.c.l.b16 %v501
      %v538 = vunpack.c.l.b16 %v502
      %v539 = vunpack.c.l.b16 %v503
      %v540 = vunpack.c.l.b16 %v504
      %v541 = vunpack.c.l.b16 %v505
      %v542 = vunpack.c.l.b16 %v506
      %v543 = vunpack.c.l.b16 %v507
      %v544 = vunpack.c.l.b16 %v508
      %v545 = vunpack.c.l.b16 %v509
      %v546 = vunpack.c.l.b16 %v510
      %v547 = vunpack.c.l.b16 %v511
      %v548 = vunpack.c.l.b16 %v512
      %v549 = vpack.c.b16 %v534, %v533
      %v550 = vpack.c.b16 %v536, %v535
      %v551 = vpack.c.b16 %v538, %v537
      %v552 = vpack.c.b16 %v540, %v539
      %v553 = vpack.c.b16 %v542, %v541
      %v554 = vpack.c.b16 %v544, %v543
      %v555 = vpack.c.b16 %v546, %v545
      %v556 = vpack.c.b16 %v548, %v547
      %v558 = vshrl.u32 %v549, 16
      %v560 = vshll.u32 %v549, 16
      %v562 = vrot.slane %v560, 1
      %v563 = vor.u32 %v558, %v562
      %v565 = vshrl.u32 %v550, 16
      %v567 = vshll.u32 %v550, 16
      %v569 = vrot.slane %v567, 1
      %v570 = vor.u32 %v565, %v569
      %v572 = vshrl.u32 %v551, 16
      %v574 = vshll.u32 %v551, 16
      %v576 = vrot.slane %v574, 1
      %v577 = vor.u32 %v572, %v576
      %v579 = vshrl.u32 %v552, 16
      %v581 = vshll.u32 %v552, 16
      %v583 = vrot.slane %v581, 1
      %v584 = vor.u32 %v579, %v583
      %v586 = vshrl.u32 %v553, 16
      %v588 = vshll.u32 %v553, 16
      %v590 = vrot.slane %v588, 1
      %v591 = vor.u32 %v586, %v590
      %v593 = vshrl.u32 %v554, 16
      %v595 = vshll.u32 %v554, 16
      %v597 = vrot.slane %v595, 1
      %v598 = vor.u32 %v593, %v597
      %v600 = vshrl.u32 %v555, 16
      %v602 = vshll.u32 %v555, 16
      %v604 = vrot.slane %v602, 1
      %v605 = vor.u32 %v600, %v604
      %v607 = vshrl.u32 %v556, 16
      %v609 = vshll.u32 %v556, 16
      %v611 = vrot.slane %v609, 1
      %v612 = vor.u32 %v607, %v611
      %613 = vrot.lane.b32.xlu0 %v563, 8
      %v614 = vpop.permute.xlu0 %613
      %615 = vrot.lane.b32.xlu0 %v570, 8
      %v616 = vpop.permute.xlu0 %615
      %617 = vrot.lane.b32.xlu0 %v577, 8
      %v618 = vpop.permute.xlu0 %617
      %619 = vrot.lane.b32.xlu0 %v584, 8
      %v620 = vpop.permute.xlu0 %619
      %621 = vrot.lane.b32.xlu0 %v591, 8
      %v622 = vpop.permute.xlu0 %621
      %623 = vrot.lane.b32.xlu0 %v598, 8
      %v624 = vpop.permute.xlu0 %623
      %625 = vrot.lane.b32.xlu0 %v605, 8
      %v626 = vpop.permute.xlu0 %625
      %627 = vrot.lane.b32.xlu0 %v612, 8
      %v628 = vpop.permute.xlu0 %627
      %v629 = vrot.slane %v549, 1
      %v630 = vrot.slane %v550, 1
      %v631 = vrot.slane %v551, 1
      %v632 = vrot.slane %v552, 1
      %v633 = vrot.slane %v553, 1
      %v634 = vrot.slane %v554, 1
      %v635 = vrot.slane %v555, 1
      %v636 = vrot.slane %v556, 1
      %637 = vrot.lane.b32.xlu0 %v629, 16
      %v638 = vpop.permute.xlu0 %637
      %639 = vrot.lane.b32.xlu0 %v630, 16
      %v640 = vpop.permute.xlu0 %639
      %641 = vrot.lane.b32.xlu0 %v631, 16
      %v642 = vpop.permute.xlu0 %641
      %643 = vrot.lane.b32.xlu0 %v632, 16
      %v644 = vpop.permute.xlu0 %643
      %645 = vrot.lane.b32.xlu0 %v633, 16
      %v646 = vpop.permute.xlu0 %645
      %647 = vrot.lane.b32.xlu0 %v634, 16
      %v648 = vpop.permute.xlu0 %647
      %649 = vrot.lane.b32.xlu0 %v635, 16
      %v650 = vpop.permute.xlu0 %649
      %651 = vrot.lane.b32.xlu0 %v636, 16
      %v652 = vpop.permute.xlu0 %651
      %v654 = vunpack.c.l.b16 %v513
      %v655 = vpack.c.b16 %v535, %v535
      %v656 = vpack.c.b16 %v537, %v537
      %v657 = vpack.c.b16 %v539, %v539
      %v658 = vpack.c.b16 %v541, %v541
      %v659 = vpack.c.b16 %v543, %v543
      %v660 = vpack.c.b16 %v545, %v545
      %v661 = vpack.c.b16 %v547, %v547
      %v662 = vpack.c.b16 %v654, %v654
      %663 = vrot.lane.b32.xlu0 %v655, 24
      %v664 = vpop.permute.xlu0 %663
      %665 = vrot.lane.b32.xlu0 %v656, 24
      %v666 = vpop.permute.xlu0 %665
      %667 = vrot.lane.b32.xlu0 %v657, 24
      %v668 = vpop.permute.xlu0 %667
      %669 = vrot.lane.b32.xlu0 %v658, 24
      %v670 = vpop.permute.xlu0 %669
      %671 = vrot.lane.b32.xlu0 %v659, 24
      %v672 = vpop.permute.xlu0 %671
      %673 = vrot.lane.b32.xlu0 %v660, 24
      %v674 = vpop.permute.xlu0 %673
      %675 = vrot.lane.b32.xlu0 %v661, 24
      %v676 = vpop.permute.xlu0 %675
      %677 = vrot.lane.b32.xlu0 %v662, 24
      %v678 = vpop.permute.xlu0 %677
      %v680 = vunpack.c.l.b16 %v514
      %v681 = vpack.c.b16 %v680, %v654
      %v683 = vshrl.u32 %v681, 16
      %v685 = vshll.u32 %v681, 16
      %v687 = vrot.slane %v685, 1
      %v688 = vor.u32 %v683, %v687
      %689 = vrot.lane.b32.xlu0 %v570, 32
      %v690 = vpop.permute.xlu0 %689
      %691 = vrot.lane.b32.xlu0 %v577, 32
      %v692 = vpop.permute.xlu0 %691
      %693 = vrot.lane.b32.xlu0 %v584, 32
      %v694 = vpop.permute.xlu0 %693
      %695 = vrot.lane.b32.xlu0 %v591, 32
      %v696 = vpop.permute.xlu0 %695
      %697 = vrot.lane.b32.xlu0 %v598, 32
      %v698 = vpop.permute.xlu0 %697
      %699 = vrot.lane.b32.xlu0 %v605, 32
      %v700 = vpop.permute.xlu0 %699
      %701 = vrot.lane.b32.xlu0 %v612, 32
      %v702 = vpop.permute.xlu0 %701
      %703 = vrot.lane.b32.xlu0 %v688, 32
      %v704 = vpop.permute.xlu0 %703
      %v705 = vrot.slane %v681, 1
      %706 = vrot.lane.b32.xlu0 %v630, 40
      %v707 = vpop.permute.xlu0 %706
      %708 = vrot.lane.b32.xlu0 %v631, 40
      %v709 = vpop.permute.xlu0 %708
      %710 = vrot.lane.b32.xlu0 %v632, 40
      %v711 = vpop.permute.xlu0 %710
      %712 = vrot.lane.b32.xlu0 %v633, 40
      %v713 = vpop.permute.xlu0 %712
      %714 = vrot.lane.b32.xlu0 %v634, 40
      %v715 = vpop.permute.xlu0 %714
      %716 = vrot.lane.b32.xlu0 %v635, 40
      %v717 = vpop.permute.xlu0 %716
      %718 = vrot.lane.b32.xlu0 %v636, 40
      %v719 = vpop.permute.xlu0 %718
      %720 = vrot.lane.b32.xlu0 %v705, 40
      %v721 = vpop.permute.xlu0 %720
      %v723 = vunpack.c.l.b16 %v515
      %v724 = vpack.c.b16 %v723, %v723
      %725 = vrot.lane.b32.xlu0 %v656, 48
      %v726 = vpop.permute.xlu0 %725
      %727 = vrot.lane.b32.xlu0 %v657, 48
      %v728 = vpop.permute.xlu0 %727
      %729 = vrot.lane.b32.xlu0 %v658, 48
      %v730 = vpop.permute.xlu0 %729
      %731 = vrot.lane.b32.xlu0 %v659, 48
      %v732 = vpop.permute.xlu0 %731
      %733 = vrot.lane.b32.xlu0 %v660, 48
      %v734 = vpop.permute.xlu0 %733
      %735 = vrot.lane.b32.xlu0 %v661, 48
      %v736 = vpop.permute.xlu0 %735
      %737 = vrot.lane.b32.xlu0 %v662, 48
      %v738 = vpop.permute.xlu0 %737
      %739 = vrot.lane.b32.xlu0 %v724, 48
      %v740 = vpop.permute.xlu0 %739
      %v742 = vunpack.c.l.b16 %v516
      %v743 = vpack.c.b16 %v742, %v723
      %v745 = vshrl.u32 %v743, 16
      %v747 = vshll.u32 %v743, 16
      %v749 = vrot.slane %v747, 1
      %v750 = vor.u32 %v745, %v749
      %751 = vrot.lane.b32.xlu0 %v577, 56
      %v752 = vpop.permute.xlu0 %751
      %753 = vrot.lane.b32.xlu0 %v584, 56
      %v754 = vpop.permute.xlu0 %753
      %755 = vrot.lane.b32.xlu0 %v591, 56
      %v756 = vpop.permute.xlu0 %755
      %757 = vrot.lane.b32.xlu0 %v598, 56
      %v758 = vpop.permute.xlu0 %757
      %759 = vrot.lane.b32.xlu0 %v605, 56
      %v760 = vpop.permute.xlu0 %759
      %761 = vrot.lane.b32.xlu0 %v612, 56
      %v762 = vpop.permute.xlu0 %761
      %763 = vrot.lane.b32.xlu0 %v688, 56
      %v764 = vpop.permute.xlu0 %763
      %765 = vrot.lane.b32.xlu0 %v750, 56
      %v766 = vpop.permute.xlu0 %765
      %v767 = vrot.slane %v743, 1
      %768 = vrot.lane.b32.xlu0 %v631, 64
      %v769 = vpop.permute.xlu0 %768
      %770 = vrot.lane.b32.xlu0 %v632, 64
      %v771 = vpop.permute.xlu0 %770
      %772 = vrot.lane.b32.xlu0 %v633, 64
      %v773 = vpop.permute.xlu0 %772
      %774 = vrot.lane.b32.xlu0 %v634, 64
      %v775 = vpop.permute.xlu0 %774
      %776 = vrot.lane.b32.xlu0 %v635, 64
      %v777 = vpop.permute.xlu0 %776
      %778 = vrot.lane.b32.xlu0 %v636, 64
      %v779 = vpop.permute.xlu0 %778
      %780 = vrot.lane.b32.xlu0 %v705, 64
      %v781 = vpop.permute.xlu0 %780
      %782 = vrot.lane.b32.xlu0 %v767, 64
      %v783 = vpop.permute.xlu0 %782
      %vm784 = vcmask 64512
      %v787 = vsel %vm784, %v497, %v614
      %v790 = vsel %vm784, %v499, %v616
      %v793 = vsel %vm784, %v501, %v618
      %v796 = vsel %vm784, %v503, %v620
      %v799 = vsel %vm784, %v505, %v622
      %v802 = vsel %vm784, %v507, %v624
      %v805 = vsel %vm784, %v509, %v626
      %v808 = vsel %vm784, %v511, %v628
      %vm809 = vcmask 130048
      %v811 = vsel %vm809, %v787, %v638
      %v813 = vsel %vm809, %v790, %v640
      %v815 = vsel %vm809, %v793, %v642
      %v817 = vsel %vm809, %v796, %v644
      %v819 = vsel %vm809, %v799, %v646
      %v821 = vsel %vm809, %v802, %v648
      %v823 = vsel %vm809, %v805, %v650
      %v825 = vsel %vm809, %v808, %v652
      %vm826 = vcmask 195584
      %v828 = vsel %vm826, %v811, %v664
      %v830 = vsel %vm826, %v813, %v666
      %v832 = vsel %vm826, %v815, %v668
      %v834 = vsel %vm826, %v817, %v670
      %v836 = vsel %vm826, %v819, %v672
      %v838 = vsel %vm826, %v821, %v674
      %v840 = vsel %vm826, %v823, %v676
      %v842 = vsel %vm826, %v825, %v678
      %vm843 = vcmask 261120
      %v845 = vsel %vm843, %v828, %v690
      %v847 = vsel %vm843, %v830, %v692
      %v849 = vsel %vm843, %v832, %v694
      %v851 = vsel %vm843, %v834, %v696
      %v853 = vsel %vm843, %v836, %v698
      %v855 = vsel %vm843, %v838, %v700
      %v857 = vsel %vm843, %v840, %v702
      %v859 = vsel %vm843, %v842, %v704
      %vm860 = vcmask 326656
      %v862 = vsel %vm860, %v845, %v707
      %v864 = vsel %vm860, %v847, %v709
      %v866 = vsel %vm860, %v849, %v711
      %v868 = vsel %vm860, %v851, %v713
      %v870 = vsel %vm860, %v853, %v715
      %v872 = vsel %vm860, %v855, %v717
      %v874 = vsel %vm860, %v857, %v719
      %v876 = vsel %vm860, %v859, %v721
      %vm877 = vcmask 392192
      %v879 = vsel %vm877, %v862, %v726
      %v881 = vsel %vm877, %v864, %v728
      %v883 = vsel %vm877, %v866, %v730
      %v885 = vsel %vm877, %v868, %v732
      %v887 = vsel %vm877, %v870, %v734
      %v889 = vsel %vm877, %v872, %v736
      %v891 = vsel %vm877, %v874, %v738
      %v893 = vsel %vm877, %v876, %v740
      %vm894 = vcmask 457728
      %v896 = vsel %vm894, %v879, %v752
      %v898 = vsel %vm894, %v881, %v754
      %v900 = vsel %vm894, %v883, %v756
      %v902 = vsel %vm894, %v885, %v758
      %v904 = vsel %vm894, %v887, %v760
      %v906 = vsel %vm894, %v889, %v762
      %v908 = vsel %vm894, %v891, %v764
      %v910 = vsel %vm894, %v893, %v766
      %vm911 = vcmask 523264
      %v913 = vsel %vm911, %v896, %v769
      %v915 = vsel %vm911, %v898, %v771
      %v917 = vsel %vm911, %v900, %v773
      %v919 = vsel %vm911, %v902, %v775
      %v921 = vsel %vm911, %v904, %v777
      %v923 = vsel %vm911, %v906, %v779
      %v925 = vsel %vm911, %v908, %v781
      %v927 = vsel %vm911, %v910, %v783
      %v928 = vld [vmem:[%s1] sm:$0xf]
      %v929 = vld [vmem:[%s1 + $0x4] sm:$0xf]
      %v930 = vld [vmem:[%s1 + $0x8] sm:$0xf]
      %v931 = vld [vmem:[%s1 + $0xc] sm:$0xf]
      %v932 = vld [vmem:[%s1 + $0x10] sm:$0xf]
      %v933 = vld [vmem:[%s1 + $0x14] sm:$0xf]
      %v934 = vld [vmem:[%s1 + $0x18] sm:$0xf]
      %v935 = vld [vmem:[%s1 + $0x1c] sm:$0xf]
      %v936 = vld [vmem:[%s1 + $0x20] sm:$0xf]
      %v945 = vunpack.c.l.b16 %v913
      %v946 = vunpack.c.l.b16 %v915
      %v947 = vunpack.c.l.b16 %v917
      %v948 = vunpack.c.l.b16 %v919
      %v949 = vunpack.c.l.b16 %v921
      %v950 = vunpack.c.l.b16 %v923
      %v951 = vunpack.c.l.b16 %v925
      %v952 = vunpack.c.l.b16 %v927
      %v953 = vpack.c.b16 %v946, %v945
      %v954 = vpack.c.b16 %v948, %v947
      %v955 = vpack.c.b16 %v950, %v949
      %v956 = vpack.c.b16 %v952, %v951
      %v966 = vunpack.c.l.b16 %v928
      %v967 = vunpack.c.l.b16 %v929
      %v968 = vunpack.c.l.b16 %v930
      %v969 = vunpack.c.l.b16 %v931
      %v970 = vunpack.c.l.b16 %v932
      %v971 = vunpack.c.l.b16 %v933
      %v972 = vunpack.c.l.b16 %v934
      %v973 = vunpack.c.l.b16 %v935
      %v974 = vunpack.c.l.b16 %v936
      %v975 = vpack.c.b16 %v967, %v966
      %v976 = vpack.c.b16 %v969, %v968
      %v977 = vpack.c.b16 %v971, %v970
      %v978 = vpack.c.b16 %v973, %v972
      %v979 = vpack.c.b16 %v974, %v974
      %vm984 = vcmask 588800
      %v986 = vsel %vm984, %v953, 0
      %v989 = vsel %vm984, %v954, 0
      %v992 = vsel %vm984, %v955, 0
      %v995 = vsel %vm984, %v956, 0
      %vm997 = vcmask 1043456
      %v999 = vsel %vm997, %v979, 0
      %1001 = vmatprep.subr.bf16.mxu0 0
      %1002 = vmatpush1.bf16.msra.mxu0 0
      %1003 = vmatprep.subr.bf16.mxu0 0
      %1004 = vmatpush1.bf16.msra.mxu0 0
      %1005 = vmatprep.subr.bf16.mxu0 0
      %1006 = vmatpush1.bf16.msra.mxu0 0
      %1007 = vmatprep.subr.bf16.mxu0 0
      %1008 = vmatpush1.bf16.msra.mxu0 %v999
      %1009 = vmatprep.subr.bf16.mxu0 0
      %1010 = vmatpush1.bf16.msra.mxu0 %v978
      %1011 = vmatprep.subr.bf16.mxu0 0
      %1012 = vmatpush1.bf16.msra.mxu0 %v977
      %1013 = vmatprep.subr.bf16.mxu0 0
      %1014 = vmatpush1.bf16.msra.mxu0 %v976
      %1015 = vmatprep.subr.bf16.mxu0 0
      %1016 = vmatpush1.bf16.msra.mxu0 %v975
      %1017 = vmatprep.subr.bf16.mxu0 0
      %1018 = vmatpush2.bf16.msra.mxu0 0
      %1019 = vmatprep.subr.bf16.mxu0 0
      %1020 = vmatpush2.bf16.msra.mxu0 0
      %1021 = vmatprep.subr.bf16.mxu0 0
      %1022 = vmatpush2.bf16.msra.mxu0 0
      %1023 = vmatprep.subr.bf16.mxu0 0
      %1024 = vmatpush2.bf16.msra.mxu0 0
      %1025 = vmatprep.subr.bf16.mxu0 0
      %1026 = vmatpush2.bf16.msra.mxu0 0
      %1027 = vmatprep.subr.bf16.mxu0 0
      %1028 = vmatpush2.bf16.msra.mxu0 0
      %1029 = vmatprep.subr.bf16.mxu0 0
      %1030 = vmatpush2.bf16.msra.mxu0 0
      %1031 = vmatprep.subr.bf16.mxu0 0
      %1032 = vmatpush2.bf16.msra.mxu0 0
      %1033 = vmatprep.mubr.bf16.mxu0 0
      %1034 = vmatmul.mubr.bf16.gmra.mxu0 %v986
      %v1035 = vpop.f32.mrf.mxu0
      %v1036 = vadd.f32 0.0, %v1035
      %v1037 = vpop.f32.mrf.mxu0
      %v1038 = vpop.f32.mrf.mxu0
      %v1039 = vadd.f32 0.0, %v1038
      %v1040 = vpop.f32.mrf.mxu0
      %1041 = vmatprep.mubr.bf16.mxu0 0
      %1042 = vmatmul.mubr.bf16.gmra.mxu0 %v989
      %v1043 = vpop.f32.mrf.mxu0
      %v1044 = vadd.f32 0.0, %v1043
      %v1045 = vpop.f32.mrf.mxu0
      %v1046 = vpop.f32.mrf.mxu0
      %v1047 = vadd.f32 0.0, %v1046
      %v1048 = vpop.f32.mrf.mxu0
      %1049 = vmatprep.mubr.bf16.mxu0 0
      %1050 = vmatmul.mubr.bf16.gmra.mxu0 %v992
      %v1051 = vpop.f32.mrf.mxu0
      %v1052 = vadd.f32 0.0, %v1051
      %v1053 = vpop.f32.mrf.mxu0
      %v1054 = vpop.f32.mrf.mxu0
      %v1055 = vadd.f32 0.0, %v1054
      %v1056 = vpop.f32.mrf.mxu0
      %1057 = vmatprep.mubr.bf16.mxu0 0
      %1058 = vmatmul.mubr.bf16.gmra.mxu0 %v995
      %v1059 = vpop.f32.mrf.mxu0
      %v1060 = vadd.f32 0.0, %v1059
      %v1061 = vpop.f32.mrf.mxu0
      %v1062 = vpop.f32.mrf.mxu0
      %v1063 = vadd.f32 0.0, %v1062
      %v1064 = vpop.f32.mrf.mxu0
      %1065 = vdwg.mxu0
      %v1066 = vpack.c.bf16 %v1036, %v1036
      %v1067 = vpack.c.bf16 %v1039, %v1039
      %v1068 = vpack.c.bf16 %v1044, %v1044
      %v1069 = vpack.c.bf16 %v1047, %v1047
      %v1070 = vpack.c.bf16 %v1052, %v1052
      %v1071 = vpack.c.bf16 %v1055, %v1055
      %v1072 = vpack.c.bf16 %v1060, %v1060
      %v1073 = vpack.c.bf16 %v1063, %v1063
      %vm1074 = vcmask 60416
      %1075 = vst.msk [vmem:[%s246] sm:$0xf] %vm1074, %v1066
      %1076 = vst.msk [vmem:[%s246 + $0x4] sm:$0xf] %vm1074, %v1067
      %1077 = vst.msk [vmem:[%s246 + $0x8] sm:$0xf] %vm1074, %v1068
      %1078 = vst.msk [vmem:[%s246 + $0xc] sm:$0xf] %vm1074, %v1069
      %1079 = vst.msk [vmem:[%s246 + $0x10] sm:$0xf] %vm1074, %v1070
      %1080 = vst.msk [vmem:[%s246 + $0x14] sm:$0xf] %vm1074, %v1071
      %1081 = vst.msk [vmem:[%s246 + $0x18] sm:$0xf] %vm1074, %v1072
      %1082 = vst.msk [vmem:[%s246 + $0x1c] sm:$0xf] %vm1074, %v1073
      %v1083 = vld [vmem:[%s5] sm:$0x1]
      %v1084 = vsel %vm784, %v1036, 0.0
      %v1085 = vsel %vm784, %v1039, 0.0
      %v1086 = vadd.f32 %v1084, %v1085
      %v1087 = vsel %vm784, %v1044, 0.0
      %v1088 = vadd.f32 %v1086, %v1087
      %v1089 = vsel %vm784, %v1047, 0.0
      %v1090 = vadd.f32 %v1088, %v1089
      %v1091 = vsel %vm784, %v1052, 0.0
      %v1092 = vadd.f32 %v1090, %v1091
      %v1093 = vsel %vm784, %v1055, 0.0
      %v1094 = vadd.f32 %v1092, %v1093
      %v1095 = vsel %vm784, %v1060, 0.0
      %v1096 = vadd.f32 %v1094, %v1095
      %v1097 = vsel %vm784, %v1063, 0.0
      %v1098 = vadd.f32 %v1096, %v1097
      %v1099 = vrot.slane %v1098, 4
      %v1100 = vadd.f32 %v1098, %v1099
      %v1101 = vrot.slane %v1100, 2
      %v1102 = vadd.f32 %v1100, %v1101
      %v1103 = vrot.slane %v1102, 1
      %v1104 = vadd.f32 %v1102, %v1103
      %v1105 = vadd.f32 %v1083, %v1104
      %vm1106 = vcmask 57344
      %1107 = vst.msk [vmem:[%s5] sm:$0x1] %vm1106, %v1105
      %v1108 = vld [vmem:[%s6] sm:$0x1]
      %v1109 = vmul.f32 %v1036, %v1036
      %v1110 = vmul.f32 %v1039, %v1039
      %v1111 = vmul.f32 %v1044, %v1044
      %v1112 = vmul.f32 %v1047, %v1047
      %v1113 = vmul.f32 %v1052, %v1052
      %v1114 = vmul.f32 %v1055, %v1055
      %v1115 = vmul.f32 %v1060, %v1060
      %v1116 = vmul.f32 %v1063, %v1063
      %v1117 = vsel %vm784, %v1109, 0.0
      %v1118 = vsel %vm784, %v1110, 0.0
      %v1119 = vadd.f32 %v1117, %v1118
      %v1120 = vsel %vm784, %v1111, 0.0
      %v1121 = vadd.f32 %v1119, %v1120
      %v1122 = vsel %vm784, %v1112, 0.0
      %v1123 = vadd.f32 %v1121, %v1122
      %v1124 = vsel %vm784, %v1113, 0.0
      %v1125 = vadd.f32 %v1123, %v1124
      %v1126 = vsel %vm784, %v1114, 0.0
      %v1127 = vadd.f32 %v1125, %v1126
      %v1128 = vsel %vm784, %v1115, 0.0
      %v1129 = vadd.f32 %v1127, %v1128
      %v1130 = vsel %vm784, %v1116, 0.0
      %v1131 = vadd.f32 %v1129, %v1130
      %v1132 = vrot.slane %v1131, 4
      %v1133 = vadd.f32 %v1131, %v1132
      %v1134 = vrot.slane %v1133, 2
      %v1135 = vadd.f32 %v1133, %v1134
      %v1136 = vrot.slane %v1135, 1
      %v1137 = vadd.f32 %v1135, %v1136
      %v1138 = vadd.f32 %v1108, %v1137
      %1139 = vst.msk [vmem:[%s6] sm:$0x1] %vm1106, %v1138
      %p1140 = scmp.lt.s32.totalorder %s18, 1
      %s1141 = scalar_select %p1140, %s18, 1
      %s1142 = smul.addr %s1141, 8
      %s1143 = smul.addr %s1142, 4
      %s1144 = scalar_lea.vmem %s4, %s1143
      // Predicated region
      $region41: #{down_forward.4} parent=35 // pred_check
        %p1145 = pneg %p125
      $region42: #{down_forward.4} parent=35 // pred_check_branch
        %1147 = sbr.rel (%p1145) target = $region44
      $region43: #{down_forward.4} parent=35 // pred_region
        _
      $region44: #{down_forward.4} parent=35 // pred_fallthru
        _
      // Predicated region
      $region45: #{down_forward.4} parent=35 // pred_check
        %p1148 = pneg %p146
      $region46: #{down_forward.4} parent=35 // pred_check_branch
        %1150 = sbr.rel (%p1148) target = $region48
      $region47: #{down_forward.4} parent=35 // pred_region
        _
      $region48: #{down_forward.4} parent=35 // pred_fallthru
        _
      // Predicated region
      $region49: #{down_forward.4} parent=35 // pred_check
        %p1151 = pneg %p167
      $region50: #{down_forward.4} parent=35 // pred_check_branch
        %1153 = sbr.rel (%p1151) target = $region52
      $region51: #{down_forward.4} parent=35 // pred_region
        _
      $region52: #{down_forward.4} parent=35 // pred_fallthru
        _
      // Predicated region
      $region53: #{down_forward.4} parent=35 // pred_check
        %p1154 = pneg %p146
      $region54: #{down_forward.4} parent=35 // pred_check_branch
        %1156 = sbr.rel (%p1154) target = $region56
      $region55: #{down_forward.4} parent=35 // pred_region
        _
      $region56: #{down_forward.4} parent=35 // pred_fallthru
        _
      // Predicated region
      $region57: #{down_forward.4} parent=35 // pred_check
        %p1157 = pneg %p167
      $region58: #{down_forward.4} parent=35 // pred_check_branch
        %1159 = sbr.rel (%p1157) target = $region60
      $region59: #{down_forward.4} parent=35 // pred_region
        _
      $region60: #{down_forward.4} parent=35 // pred_fallthru
        _
    $region36: #{down_forward.4} parent=5 // pred_fallthru
      _
    %p1160 = scmp.le.s32.totalorder 2, %s13
    // Predicated region
    $region61: #{down_forward.4} parent=5 // pred_check
      %p1161 = pneg %p1160
    $region62: #{down_forward.4} parent=5 // pred_check_branch
      %1163 = sbr.rel (%p1161) target = $region64
    $region63: #{down_forward.4} parent=5 // pred_region
      %s1164 = ssub.s32 %s13, 2
      // Predicated region
      $region65: #{down_forward.4} parent=63 // pred_check
        %p1165 = pneg %p131
      $region66: #{down_forward.4} parent=63 // pred_check_branch
        %1167 = sbr.rel (%p1165) target = $region68
      $region67: #{down_forward.4} parent=63 // pred_region
        %p1168 = scmp.lt.s32.totalorder %s19, 1
        %s1169 = scalar_select %p1168, %s19, 1
        %s1170 = smul.addr %s1169, 8
        %s1171 = smul.addr %s1170, 4
        %s1172 = scalar_lea.vmem %s4, %s1171
      $region68: #{down_forward.4} parent=63 // pred_fallthru
        _
    $region64: #{down_forward.4} parent=5 // pred_fallthru
      _
  $region6: #{down_forward.4} parent=0 // loop_footer
    %s17 = sadd.s32 1, %s13
  $region7: #{down_forward.4} parent=0 // loop_footer_branch
    %12 = sbr.rel target = $region3
  $region8: #{down_forward.4} parent=0 // loop_exit
    _

</llo_original>
